<compile_context>
chip_gen: v7x
topology: tpu7x:2x2x1
jax: 0.10.0
libtpu: 0.0.40
codegen_flags: <defaults>
</compile_context>

<pallas_src>
import jax
import jax.numpy as jnp
from jax.experimental import pallas as pl
from jax.experimental.pallas import tpu as pltpu


def _disc_kernel(x_ref, w1_ref, b1_ref, w2_ref, b2_ref, wc_ref, bc_ref, o_ref):
    """Fused 3-layer 1x1-conv MLP on one (C, T) pixel tile (pixels on lanes).

    x_ref : (C, T)      f32  (cast to bf16 in-kernel; VPU cast hides under MXU)
    w*_ref: (Cout, Cin) bf16 conv weights in matmul form
    b*_ref: (Cout, 1)   f32
    o_ref : (1, T)      f32  lane-dense output tile
    """
    neg = 0.2
    x = x_ref[...].astype(jnp.bfloat16)                                # (C, T)
    h = jnp.dot(w1_ref[...], x, preferred_element_type=jnp.float32)    # (H1,T) f32
    h = h + b1_ref[...]
    h = jnp.where(h > 0, h, neg * h)

    h = jnp.dot(w2_ref[...], h.astype(jnp.bfloat16),
                preferred_element_type=jnp.float32)                    # (H2,T) f32
    h = h + b2_ref[...]
    h = jnp.where(h > 0, h, neg * h)

    # TODO(synk): the (1,H2)x(H2,T) classifier could optionally run on the
    # VPU+XLU (broadcast-mul + cross-sublane reduce) to free ~8% of MXU passes.
    o_ref[...] = jnp.dot(wc_ref[...], h.astype(jnp.bfloat16),
                         preferred_element_type=jnp.float32) + bc_ref[...]


def _round_up(x, m):
    return (x + m - 1) // m * m


def _default_vmem_limit():
    # ~70% of physical VMEM (~45 MiB on v7x, ~89 MiB on v5e/v6e).
    try:
        cap = getattr(pltpu.get_tpu_info(), "vmem_capacity_bytes", None)
        if cap:
            return int(cap) * 7 // 10
    except Exception:
        pass
    return 40 << 20


def _choose_row_tile(hw):
    """Pixel-tile (lane) width per grid step.

    * hw small and not lane-aligned -> full-extent tile (no HBM pad copy,
      single pixel step per batch; typical ROI 7x7 case).
    * otherwise a multiple of 128 capped at 1024; never drop below 256 just to
      buy grid steps (compute-bound; v6e/v7x MXU is 256 wide in N), and avoid
      tiles that are mostly padding.
    """
    if hw % 128 != 0 and hw <= 1024:
        return hw
    t = min(1024, _round_up(hw, 128))
    while t > 256 and _round_up(hw, t) - hw >= t // 2:
        t //= 2
    return t


def _const_spec(block_shape, single_buffer):
    ndim = len(block_shape)
    index_map = lambda b, i: (0,) * ndim
    if single_buffer:
        # Constant across the whole grid -> single buffer (no double-buffering).
        return pl.BlockSpec(block_shape, index_map, pipeline_mode=pl.Buffered(1))
    return pl.BlockSpec(block_shape, index_map)


def _build_and_run(x3, w1_b, b1_c, w2_b, b2_c, wc_b, bc_c, *, row_tile,
                   vmem_limit_bytes, cost, single_buffer_consts):
    n, c, hw_p = x3.shape
    h1 = w1_b.shape[0]
    h2 = w2_b.shape[0]
    grid = (n, hw_p // row_tile)
    # v7x note: both grid axes are "parallel"; n * (hw_p // row_tile) is even
    # for typical batch sizes, keeping both TensorCores busy.
    return pl.pallas_call(
        _disc_kernel,
        out_shape=jax.ShapeDtypeStruct((n, 1, hw_p), jnp.float32),
        grid_spec=pltpu.PrefetchScalarGridSpec(
            num_scalar_prefetch=0,
            grid=grid,
            in_specs=[
                # X tile straight from the NCHW view: (1, C, T) -> (C, T), f32.
                pl.BlockSpec((pl.Squeezed(), c, row_tile),
                             lambda b, i: (b, 0, i)),
                _const_spec((h1, c), single_buffer_consts),   # W1
                _const_spec((h1, 1), single_buffer_consts),   # b1
                _const_spec((h2, h1), single_buffer_consts),  # W2
                _const_spec((h2, 1), single_buffer_consts),   # b2
                _const_spec((1, h2), single_buffer_consts),   # Wc
                _const_spec((1, 1), single_buffer_consts),    # bc
            ],
            out_specs=pl.BlockSpec((pl.Squeezed(), 1, row_tile),
                                   lambda b, i: (b, 0, i)),
        ),
        compiler_params=pltpu.CompilerParams(
            dimension_semantics=("parallel", "parallel"),
            vmem_limit_bytes=vmem_limit_bytes,
        ),
        cost_estimate=cost,
    )(x3, w1_b, b1_c, w2_b, b2_c, wc_b, bc_c)


def domain_discriminator_roi_forward(x_nchw, params, *, row_tile=None,
                                     vmem_limit_bytes=None):
    """Forward pass. x_nchw: (N, C, H, W) float32. Returns (N, 1, H, W) float32.

    GradReverse is the identity in forward, so this is
    conv1 -> LeakyReLU(0.2) -> conv2 -> LeakyReLU(0.2) -> classifier,
    i.e. a per-pixel 3-layer MLP over the channel axis.
    """
    w1, b1, w2, b2, wc, bc = params            # w1:(H1,C) w2:(H2,H1) wc:(1,H2)
    n, c, hgt, wid = x_nchw.shape
    hw = hgt * wid
    h1 = w1.shape[0]
    h2 = w2.shape[0]

    # No pre-pass over X: (N,C,H,W) -> (N,C,H*W) is a free view; the kernel
    # reads f32 tiles directly and casts to bf16 on the VPU.
    x3 = x_nchw.reshape(n, c, hw).astype(jnp.float32)

    if row_tile is None:
        row_tile = _choose_row_tile(hw)
    row_tile = int(row_tile)
    if row_tile != hw:
        row_tile = max(128, _round_up(row_tile, 128))
        row_tile = min(row_tile, _round_up(hw, 128))
    hw_p = hw if row_tile == hw else _round_up(hw, row_tile)
    if hw_p != hw:
        x3 = jnp.pad(x3, ((0, 0), (0, 0), (0, hw_p - hw)))

    # bf16 weights for the MXU; biases stay f32 (f32 accumulation + VPU math).
    w1_b = w1.astype(jnp.bfloat16)
    w2_b = w2.astype(jnp.bfloat16)
    wc_b = wc.reshape(1, h2).astype(jnp.bfloat16)
    b1_c = b1.reshape(h1, 1).astype(jnp.float32)
    b2_c = b2.reshape(h2, 1).astype(jnp.float32)
    bc_c = bc.reshape(1, 1).astype(jnp.float32)

    if vmem_limit_bytes is None:
        vmem_limit_bytes = _default_vmem_limit()

    flops = 2 * n * hw_p * (c * h1 + h1 * h2 + h2)
    bytes_accessed = (n * c * hw_p * 4                      # X (f32)
                      + (h1 * c + h2 * h1 + h2) * 2         # weights (bf16)
                      + (h1 + h2 + 1) * 4                   # biases (f32)
                      + n * hw_p * 4)                       # output (f32)
    cost = pl.CostEstimate(flops=int(flops), transcendentals=0,
                           bytes_accessed=int(bytes_accessed))

    kwargs = dict(row_tile=row_tile, vmem_limit_bytes=vmem_limit_bytes, cost=cost)
    try:
        out = _build_and_run(x3, w1_b, b1_c, w2_b, b2_c, wc_b, bc_c,
                             single_buffer_consts=True, **kwargs)
    except Exception:
        # Fallback for jax versions without BlockSpec(pipeline_mode=...):
        # identical semantics, just default double-buffered constants.
        out = _build_and_run(x3, w1_b, b1_c, w2_b, b2_c, wc_b, bc_c,
                             single_buffer_consts=False, **kwargs)

    return out[:, :, :hw].reshape(n, 1, hgt, wid)


def init_params(key, n_in, hidden):
    """Deterministic synthetic init; weights kept in conv (Cout, Cin) form."""
    k1, k2, k3, k4, k5, k6 = jax.random.split(key, 6)
    s1 = 1.0 / jnp.sqrt(n_in)
    s2 = 1.0 / jnp.sqrt(hidden)
    w1 = jax.random.normal(k1, (hidden, n_in), jnp.float32) * s1
    b1 = jax.random.normal(k2, (hidden,), jnp.float32) * 0.01
    w2 = jax.random.normal(k3, (hidden, hidden), jnp.float32) * s2
    b2 = jax.random.normal(k4, (hidden,), jnp.float32) * 0.01
    wc = jax.random.normal(k5, (1, hidden), jnp.float32) * s2
    bc = jax.random.normal(k6, (1,), jnp.float32) * 0.01
    return (w1, b1, w2, b2, wc, bc)


def _reference_forward(x_nchw, params):
    """Pure-JAX f32 reference (1x1 convs as einsums over the channel axis)."""
    w1, b1, w2, b2, wc, bc = params
    leaky = lambda t: jnp.where(t > 0, t, 0.2 * t)
    h = leaky(jnp.einsum("oc,nchw->nohw", w1, x_nchw) + b1[None, :, None, None])
    h = leaky(jnp.einsum("oc,nchw->nohw", w2, h) + b2[None, :, None, None])
    return jnp.einsum("oc,nchw->nohw", wc, h) + bc[None, :, None, None]


if __name__ == "__main__":
    # Module defaults are n_in=2048, hidden=1024; scaled down for the test.
    C, HIDDEN = 256, 128
    key = jax.random.PRNGKey(0)
    kx1, kx2, kx3, kp = jax.random.split(key, 4)
    params = init_params(kp, C, HIDDEN)

    # Case 1: lane-aligned spatial (hw=256 -> one 256-lane tile per batch).
    x1 = jax.random.normal(kx1, (2, C, 16, 16), jnp.float32)
    y1 = jax.block_until_ready(domain_discriminator_roi_forward(x1, params))
    r1 = _reference_forward(x1, params)
    assert y1.shape == (2, 1, 16, 16)
    assert jnp.allclose(y1, r1, rtol=5e-2, atol=5e-2), \
        float(jnp.max(jnp.abs(y1 - r1)))

    # Case 2: ROI-style 7x7 (hw=49 -> full-extent lane tile, no pad copy).
    x2 = jax.random.normal(kx2, (2, C, 7, 7), jnp.float32)
    y2 = jax.block_until_ready(domain_discriminator_roi_forward(x2, params))
    r2 = _reference_forward(x2, params)
    assert y2.shape == (2, 1, 7, 7)
    assert jnp.allclose(y2, r2, rtol=5e-2, atol=5e-2), \
        float(jnp.max(jnp.abs(y2 - r2)))

    # Case 3: forced multi-step pixel grid with padding (hw=192, tile=128 -> 2 steps).
    x3 = jax.random.normal(kx3, (2, C, 8, 24), jnp.float32)
    y3 = jax.block_until_ready(
        domain_discriminator_roi_forward(x3, params, row_tile=128))
    r3 = _reference_forward(x3, params)
    assert y3.shape == (2, 1, 8, 24)
    assert jnp.allclose(y3, r3, rtol=5e-2, atol=5e-2), \
        float(jnp.max(jnp.abs(y3 - r3)))

    print("KERNEL_OK")
</pallas_src>

<mosaic_0001>
module attributes {stable_mosaic.version = 11 : i64} {
  func.func @_disc_kernel(%arg0: i32, %arg1: i32, %arg2: memref<1x256x256xf32, #tpu.memory_space<vmem>>, %arg3: memref<128x256xbf16, #tpu.memory_space<vmem>>, %arg4: memref<128x1xf32, #tpu.memory_space<vmem>>, %arg5: memref<128x128xbf16, #tpu.memory_space<vmem>>, %arg6: memref<128x1xf32, #tpu.memory_space<vmem>>, %arg7: memref<1x128xbf16, #tpu.memory_space<vmem>>, %arg8: memref<1x1xf32, #tpu.memory_space<vmem>>, %arg9: memref<1x1x256xf32, #tpu.memory_space<vmem>>) attributes {dimension_semantics = [#tpu.dimension_semantics<parallel>, #tpu.dimension_semantics<parallel>], iteration_bounds = array<i64: 2, 1>, scalar_prefetch = 0 : i64, scratch_operands = 0 : i64, tpu.core_type = #tpu.core_type<tc>, window_params = [{transform_indices = @transform_0, window_bounds = array<i64: 1, 256, 256>}, {pipeline_mode = #tpu.pipeline_mode<synchronous>, transform_indices = @transform_1, window_bounds = array<i64: 128, 256>}, {pipeline_mode = #tpu.pipeline_mode<synchronous>, transform_indices = @transform_2, window_bounds = array<i64: 128, 1>}, {pipeline_mode = #tpu.pipeline_mode<synchronous>, transform_indices = @transform_3, window_bounds = array<i64: 128, 128>}, {pipeline_mode = #tpu.pipeline_mode<synchronous>, transform_indices = @transform_4, window_bounds = array<i64: 128, 1>}, {pipeline_mode = #tpu.pipeline_mode<synchronous>, transform_indices = @transform_5, window_bounds = array<i64: 1, 128>}, {pipeline_mode = #tpu.pipeline_mode<synchronous>, transform_indices = @transform_6, window_bounds = array<i64: 1, 1>}, {transform_indices = @transform_7, window_bounds = array<i64: 1, 1, 256>}]} {
    %c0 = arith.constant 0 : index
    %c0_0 = arith.constant 0 : index
    %c0_1 = arith.constant 0 : index
    %0 = vector.load %arg2[%c0, %c0_0, %c0_1] : memref<1x256x256xf32, #tpu.memory_space<vmem>>, vector<1x256x256xf32>
    %1 = vector.shape_cast %0 : vector<1x256x256xf32> to vector<256x256xf32>
    %2 = arith.truncf %1 : vector<256x256xf32> to vector<256x256xbf16>
    %c0_2 = arith.constant 0 : index
    %c0_3 = arith.constant 0 : index
    %3 = vector.load %arg3[%c0_2, %c0_3] : memref<128x256xbf16, #tpu.memory_space<vmem>>, vector<128x256xbf16>
    %cst = arith.constant dense<0.000000e+00> : vector<128x256xf32>
    %4 = tpu.matmul %3, %2, %cst {dimension_numbers = #tpu.dot_dimension_numbers<[1], [0], [0], [1], [0, 0, 1, 1], [], []>} : vector<128x256xbf16>, vector<256x256xbf16>, vector<128x256xf32> -> vector<128x256xf32>
    %c0_4 = arith.constant 0 : index
    %c0_5 = arith.constant 0 : index
    %5 = vector.load %arg4[%c0_4, %c0_5] : memref<128x1xf32, #tpu.memory_space<vmem>>, vector<128x1xf32>
    %6 = vector.broadcast %5 : vector<128x1xf32> to vector<128x256xf32>
    %7 = arith.addf %4, %6 : vector<128x256xf32>
    %cst_6 = arith.constant 0.000000e+00 : f32
    %8 = vector.broadcast %cst_6 : f32 to vector<128x256xf32>
    %9 = arith.cmpf ogt, %7, %8 : vector<128x256xf32>
    %cst_7 = arith.constant 2.000000e-01 : f32
    %10 = vector.broadcast %cst_7 : f32 to vector<128x256xf32>
    %11 = arith.mulf %10, %7 : vector<128x256xf32>
    %12 = arith.select %9, %7, %11 : vector<128x256xi1>, vector<128x256xf32>
    %c0_8 = arith.constant 0 : index
    %c0_9 = arith.constant 0 : index
    %13 = vector.load %arg5[%c0_8, %c0_9] : memref<128x128xbf16, #tpu.memory_space<vmem>>, vector<128x128xbf16>
    %14 = arith.truncf %12 : vector<128x256xf32> to vector<128x256xbf16>
    %cst_10 = arith.constant dense<0.000000e+00> : vector<128x256xf32>
    %15 = tpu.matmul %13, %14, %cst_10 {dimension_numbers = #tpu.dot_dimension_numbers<[1], [0], [0], [1], [0, 0, 1, 1], [], []>} : vector<128x128xbf16>, vector<128x256xbf16>, vector<128x256xf32> -> vector<128x256xf32>
    %c0_11 = arith.constant 0 : index
    %c0_12 = arith.constant 0 : index
    %16 = vector.load %arg6[%c0_11, %c0_12] : memref<128x1xf32, #tpu.memory_space<vmem>>, vector<128x1xf32>
    %17 = vector.broadcast %16 : vector<128x1xf32> to vector<128x256xf32>
    %18 = arith.addf %15, %17 : vector<128x256xf32>
    %cst_13 = arith.constant 0.000000e+00 : f32
    %19 = vector.broadcast %cst_13 : f32 to vector<128x256xf32>
    %20 = arith.cmpf ogt, %18, %19 : vector<128x256xf32>
    %cst_14 = arith.constant 2.000000e-01 : f32
    %21 = vector.broadcast %cst_14 : f32 to vector<128x256xf32>
    %22 = arith.mulf %21, %18 : vector<128x256xf32>
    %23 = arith.select %20, %18, %22 : vector<128x256xi1>, vector<128x256xf32>
    %c0_15 = arith.constant 0 : index
    %c0_16 = arith.constant 0 : index
    %24 = vector.load %arg7[%c0_15, %c0_16] : memref<1x128xbf16, #tpu.memory_space<vmem>>, vector<1x128xbf16>
    %25 = arith.truncf %23 : vector<128x256xf32> to vector<128x256xbf16>
    %cst_17 = arith.constant dense<0.000000e+00> : vector<1x256xf32>
    %26 = tpu.matmul %24, %25, %cst_17 {dimension_numbers = #tpu.dot_dimension_numbers<[1], [0], [0], [1], [0, 0, 1, 1], [], []>} : vector<1x128xbf16>, vector<128x256xbf16>, vector<1x256xf32> -> vector<1x256xf32>
    %c0_18 = arith.constant 0 : index
    %c0_19 = arith.constant 0 : index
    %27 = vector.load %arg8[%c0_18, %c0_19] : memref<1x1xf32, #tpu.memory_space<vmem>>, vector<1x1xf32>
    %28 = vector.broadcast %27 : vector<1x1xf32> to vector<1x256xf32>
    %29 = arith.addf %26, %28 : vector<1x256xf32>
    %c0_20 = arith.constant 0 : index
    %c0_21 = arith.constant 0 : index
    %c0_22 = arith.constant 0 : index
    %30 = vector.load %arg9[%c0_20, %c0_21, %c0_22] : memref<1x1x256xf32, #tpu.memory_space<vmem>>, vector<1x1x256xf32>
    %31 = vector.shape_cast %30 : vector<1x1x256xf32> to vector<1x256xf32>
    %32 = vector.shape_cast %29 : vector<1x256xf32> to vector<1x1x256xf32>
    tpu.vector_store %arg9[%c0_20, %c0_21, %c0_22], %32 {strides = array<i32>} : memref<1x1x256xf32, #tpu.memory_space<vmem>>, vector<1x1x256xf32>,
    return
  }
  func.func @transform_0(%arg0: i32, %arg1: i32) -> (i32, i32, i32) {
    %c0_i32 = arith.constant 0 : i32
    %c0_i32_0 = arith.constant 0 : i32
    return %arg0, %c0_i32, %arg1 : i32, i32, i32
  }
  func.func @transform_1(%arg0: i32, %arg1: i32) -> (i32, i32) {
    %c0_i32 = arith.constant 0 : i32
    %c0_i32_0 = arith.constant 0 : i32
    %c0_i32_1 = arith.constant 0 : i32
    return %c0_i32, %c0_i32_0 : i32, i32
  }
  func.func @transform_2(%arg0: i32, %arg1: i32) -> (i32, i32) {
    %c0_i32 = arith.constant 0 : i32
    %c0_i32_0 = arith.constant 0 : i32
    %c0_i32_1 = arith.constant 0 : i32
    return %c0_i32, %c0_i32_0 : i32, i32
  }
  func.func @transform_3(%arg0: i32, %arg1: i32) -> (i32, i32) {
    %c0_i32 = arith.constant 0 : i32
    %c0_i32_0 = arith.constant 0 : i32
    %c0_i32_1 = arith.constant 0 : i32
    return %c0_i32, %c0_i32_0 : i32, i32
  }
  func.func @transform_4(%arg0: i32, %arg1: i32) -> (i32, i32) {
    %c0_i32 = arith.constant 0 : i32
    %c0_i32_0 = arith.constant 0 : i32
    %c0_i32_1 = arith.constant 0 : i32
    return %c0_i32, %c0_i32_0 : i32, i32
  }
  func.func @transform_5(%arg0: i32, %arg1: i32) -> (i32, i32) {
    %c0_i32 = arith.constant 0 : i32
    %c0_i32_0 = arith.constant 0 : i32
    %c0_i32_1 = arith.constant 0 : i32
    return %c0_i32, %c0_i32_0 : i32, i32
  }
  func.func @transform_6(%arg0: i32, %arg1: i32) -> (i32, i32) {
    %c0_i32 = arith.constant 0 : i32
    %c0_i32_0 = arith.constant 0 : i32
    %c0_i32_1 = arith.constant 0 : i32
    return %c0_i32, %c0_i32_0 : i32, i32
  }
  func.func @transform_7(%arg0: i32, %arg1: i32) -> (i32, i32, i32) {
    %c0_i32 = arith.constant 0 : i32
    %c0_i32_0 = arith.constant 0 : i32
    return %arg0, %c0_i32, %arg1 : i32, i32, i32
  }
}

module attributes {stable_mosaic.version = 11 : i64} {
  func.func @_disc_kernel(%arg0: i32, %arg1: i32, %arg2: memref<1x256x256xf32, #tpu.memory_space<vmem>>, %arg3: memref<128x256xbf16, #tpu.memory_space<vmem>>, %arg4: memref<128x1xf32, #tpu.memory_space<vmem>>, %arg5: memref<128x128xbf16, #tpu.memory_space<vmem>>, %arg6: memref<128x1xf32, #tpu.memory_space<vmem>>, %arg7: memref<1x128xbf16, #tpu.memory_space<vmem>>, %arg8: memref<1x1xf32, #tpu.memory_space<vmem>>, %arg9: memref<1x1x256xf32, #tpu.memory_space<vmem>>) attributes {dimension_semantics = [#tpu.dimension_semantics<parallel>, #tpu.dimension_semantics<parallel>], iteration_bounds = array<i64: 2, 1>, scalar_prefetch = 0 : i64, scratch_operands = 0 : i64, tpu.core_type = #tpu.core_type<tc>, window_params = [{transform_indices = @transform_0, window_bounds = array<i64: 1, 256, 256>}, {pipeline_mode = #tpu.pipeline_mode<synchronous>, transform_indices = @transform_1, window_bounds = array<i64: 128, 256>}, {pipeline_mode = #tpu.pipeline_mode<synchronous>, transform_indices = @transform_2, window_bounds = array<i64: 128, 1>}, {pipeline_mode = #tpu.pipeline_mode<synchronous>, transform_indices = @transform_3, window_bounds = array<i64: 128, 128>}, {pipeline_mode = #tpu.pipeline_mode<synchronous>, transform_indices = @transform_4, window_bounds = array<i64: 128, 1>}, {pipeline_mode = #tpu.pipeline_mode<synchronous>, transform_indices = @transform_5, window_bounds = array<i64: 1, 128>}, {pipeline_mode = #tpu.pipeline_mode<synchronous>, transform_indices = @transform_6, window_bounds = array<i64: 1, 1>}, {transform_indices = @transform_7, window_bounds = array<i64: 1, 1, 256>}]} {
    %c0 = arith.constant 0 : index
    %c0_0 = arith.constant 0 : index
    %c0_1 = arith.constant 0 : index
    %0 = vector.load %arg2[%c0, %c0_0, %c0_1] : memref<1x256x256xf32, #tpu.memory_space<vmem>>, vector<1x256x256xf32>
    %1 = vector.shape_cast %0 : vector<1x256x256xf32> to vector<256x256xf32>
    %2 = arith.truncf %1 : vector<256x256xf32> to vector<256x256xbf16>
    %c0_2 = arith.constant 0 : index
    %c0_3 = arith.constant 0 : index
    %3 = vector.load %arg3[%c0_2, %c0_3] : memref<128x256xbf16, #tpu.memory_space<vmem>>, vector<128x256xbf16>
    %cst = arith.constant dense<0.000000e+00> : vector<128x256xf32>
    %4 = tpu.matmul %3, %2, %cst {dimension_numbers = #tpu.dot_dimension_numbers<[1], [0], [0], [1], [0, 0, 1, 1], [], []>} : vector<128x256xbf16>, vector<256x256xbf16>, vector<128x256xf32> -> vector<128x256xf32>
    %c0_4 = arith.constant 0 : index
    %c0_5 = arith.constant 0 : index
    %5 = vector.load %arg4[%c0_4, %c0_5] : memref<128x1xf32, #tpu.memory_space<vmem>>, vector<128x1xf32>
    %6 = vector.broadcast %5 : vector<128x1xf32> to vector<128x256xf32>
    %7 = arith.addf %4, %6 : vector<128x256xf32>
    %cst_6 = arith.constant 0.000000e+00 : f32
    %8 = vector.broadcast %cst_6 : f32 to vector<128x256xf32>
    %9 = arith.cmpf ogt, %7, %8 : vector<128x256xf32>
    %cst_7 = arith.constant 2.000000e-01 : f32
    %10 = vector.broadcast %cst_7 : f32 to vector<128x256xf32>
    %11 = arith.mulf %10, %7 : vector<128x256xf32>
    %12 = arith.select %9, %7, %11 : vector<128x256xi1>, vector<128x256xf32>
    %c0_8 = arith.constant 0 : index
    %c0_9 = arith.constant 0 : index
    %13 = vector.load %arg5[%c0_8, %c0_9] : memref<128x128xbf16, #tpu.memory_space<vmem>>, vector<128x128xbf16>
    %14 = arith.truncf %12 : vector<128x256xf32> to vector<128x256xbf16>
    %cst_10 = arith.constant dense<0.000000e+00> : vector<128x256xf32>
    %15 = tpu.matmul %13, %14, %cst_10 {dimension_numbers = #tpu.dot_dimension_numbers<[1], [0], [0], [1], [0, 0, 1, 1], [], []>} : vector<128x128xbf16>, vector<128x256xbf16>, vector<128x256xf32> -> vector<128x256xf32>
    %c0_11 = arith.constant 0 : index
    %c0_12 = arith.constant 0 : index
    %16 = vector.load %arg6[%c0_11, %c0_12] : memref<128x1xf32, #tpu.memory_space<vmem>>, vector<128x1xf32>
    %17 = vector.broadcast %16 : vector<128x1xf32> to vector<128x256xf32>
    %18 = arith.addf %15, %17 : vector<128x256xf32>
    %cst_13 = arith.constant 0.000000e+00 : f32
    %19 = vector.broadcast %cst_13 : f32 to vector<128x256xf32>
    %20 = arith.cmpf ogt, %18, %19 : vector<128x256xf32>
    %cst_14 = arith.constant 2.000000e-01 : f32
    %21 = vector.broadcast %cst_14 : f32 to vector<128x256xf32>
    %22 = arith.mulf %21, %18 : vector<128x256xf32>
    %23 = arith.select %20, %18, %22 : vector<128x256xi1>, vector<128x256xf32>
    %c0_15 = arith.constant 0 : index
    %c0_16 = arith.constant 0 : index
    %24 = vector.load %arg7[%c0_15, %c0_16] : memref<1x128xbf16, #tpu.memory_space<vmem>>, vector<1x128xbf16>
    %25 = arith.truncf %23 : vector<128x256xf32> to vector<128x256xbf16>
    %cst_17 = arith.constant dense<0.000000e+00> : vector<1x256xf32>
    %26 = tpu.matmul %24, %25, %cst_17 {dimension_numbers = #tpu.dot_dimension_numbers<[1], [0], [0], [1], [0, 0, 1, 1], [], []>} : vector<1x128xbf16>, vector<128x256xbf16>, vector<1x256xf32> -> vector<1x256xf32>
    %c0_18 = arith.constant 0 : index
    %c0_19 = arith.constant 0 : index
    %27 = vector.load %arg8[%c0_18, %c0_19] : memref<1x1xf32, #tpu.memory_space<vmem>>, vector<1x1xf32>
    %28 = vector.broadcast %27 : vector<1x1xf32> to vector<1x256xf32>
    %29 = arith.addf %26, %28 : vector<1x256xf32>
    %c0_20 = arith.constant 0 : index
    %c0_21 = arith.constant 0 : index
    %c0_22 = arith.constant 0 : index
    %30 = vector.load %arg9[%c0_20, %c0_21, %c0_22] : memref<1x1x256xf32, #tpu.memory_space<vmem>>, vector<1x1x256xf32>
    %31 = vector.shape_cast %30 : vector<1x1x256xf32> to vector<1x256xf32>
    %32 = vector.shape_cast %29 : vector<1x256xf32> to vector<1x1x256xf32>
    tpu.vector_store %arg9[%c0_20, %c0_21, %c0_22], %32 {strides = array<i32>} : memref<1x1x256xf32, #tpu.memory_space<vmem>>, vector<1x1x256xf32>,
    return
  }
  func.func @transform_0(%arg0: i32, %arg1: i32) -> (i32, i32, i32) {
    %c0_i32 = arith.constant 0 : i32
    %c0_i32_0 = arith.constant 0 : i32
    return %arg0, %c0_i32, %arg1 : i32, i32, i32
  }
  func.func @transform_1(%arg0: i32, %arg1: i32) -> (i32, i32) {
    %c0_i32 = arith.constant 0 : i32
    %c0_i32_0 = arith.constant 0 : i32
    %c0_i32_1 = arith.constant 0 : i32
    return %c0_i32, %c0_i32_0 : i32, i32
  }
  func.func @transform_2(%arg0: i32, %arg1: i32) -> (i32, i32) {
    %c0_i32 = arith.constant 0 : i32
    %c0_i32_0 = arith.constant 0 : i32
    %c0_i32_1 = arith.constant 0 : i32
    return %c0_i32, %c0_i32_0 : i32, i32
  }
  func.func @transform_3(%arg0: i32, %arg1: i32) -> (i32, i32) {
    %c0_i32 = arith.constant 0 : i32
    %c0_i32_0 = arith.constant 0 : i32
    %c0_i32_1 = arith.constant 0 : i32
    return %c0_i32, %c0_i32_0 : i32, i32
  }
  func.func @transform_4(%arg0: i32, %arg1: i32) -> (i32, i32) {
    %c0_i32 = arith.constant 0 : i32
    %c0_i32_0 = arith.constant 0 : i32
    %c0_i32_1 = arith.constant 0 : i32
    return %c0_i32, %c0_i32_0 : i32, i32
  }
  func.func @transform_5(%arg0: i32, %arg1: i32) -> (i32, i32) {
    %c0_i32 = arith.constant 0 : i32
    %c0_i32_0 = arith.constant 0 : i32
    %c0_i32_1 = arith.constant 0 : i32
    return %c0_i32, %c0_i32_0 : i32, i32
  }
  func.func @transform_6(%arg0: i32, %arg1: i32) -> (i32, i32) {
    %c0_i32 = arith.constant 0 : i32
    %c0_i32_0 = arith.constant 0 : i32
    %c0_i32_1 = arith.constant 0 : i32
    return %c0_i32, %c0_i32_0 : i32, i32
  }
  func.func @transform_7(%arg0: i32, %arg1: i32) -> (i32, i32, i32) {
    %c0_i32 = arith.constant 0 : i32
    %c0_i32_0 = arith.constant 0 : i32
    return %arg0, %c0_i32, %arg1 : i32, i32, i32
  }
}

</mosaic_0001>

<llo_original>
// kernel: tpu_custom_call.1
$region0: #{tpu_custom_call.1}
  #allocation0 [shape = 'u32[]', space=smem, size = 0x4, offset = 0x4, fixed_abs, tag = 'smem constant byte address 0x4 - core index']
  #allocation1 [shape = 'u32[144,128]{1,0:T(1,128)}', space=vmem, size = 0x12000, scoped, tag = 'internal scratch']
  #allocation2 [shape = 'f32[1,1]{1,0:T(1,128)S(1)}', space=vmem, size = 0x200, scoped, tag = 'scoped memory for tpu_custom_call.1']
  %s0 = inlined_call_operand.hbm [shape: f32[2,256,256], index: 0, kind: input, shape index: {}]
  %s1 = inlined_call_operand.vmem [shape: bf16[128,256], index: 1, kind: input, shape index: {}]
  %s2 = inlined_call_operand.vmem [shape: f32[128,1], index: 2, kind: input, shape index: {}]
  %s3 = inlined_call_operand.vmem [shape: bf16[128,128], index: 3, kind: input, shape index: {}]
  %s4 = inlined_call_operand.vmem [shape: f32[128,1], index: 4, kind: input, shape index: {}]
  %s5 = inlined_call_operand.vmem [shape: bf16[1,128], index: 5, kind: input, shape index: {}]
  %s6 = inlined_call_operand.<no memory space> [shape: f32[1,1], index: 6, kind: input, shape index: {}]
  %s7 = inlined_call_operand.hbm [shape: f32[2,1,256], index: 7, kind: output, shape index: {}]
  %s8 = sld [smem:[#allocation0]]
  $region65: #{tpu_custom_call.1} parent=0
    _
  %s10 = ssub.s32 1, %s8
  %s11 = scalar_select 0, %s10, %s8
  %v12 = vstv %s6
  %13 = vst [vmem:[#allocation2] sm:$0x1] %v12
  $region1: #{tpu_custom_call.1} parent=0
    #allocation3 [shape = 'u8[524288]{0}', space=vmem, size = 0x80000, scoped, tag = 'input window, operand 0']
    #allocation4 [shape = 's32[2]{0}', space=sflag, size = 0x8, scoped, tag = 'scoped memory for tpu_custom_call.1']
    #allocation5 [shape = 's32[2]{0}', space=sflag, size = 0x8, scoped, tag = 'scoped memory for tpu_custom_call.1']
    #allocation6 [shape = 'u8[2048]{0}', space=vmem, size = 0x800, scoped, tag = 'output window, operand 0']
    %14 = vsyncpa [#allocation4], 0
    %s15 = scalar_lea.sflag [#allocation4], 1
    %16 = vsyncpa %s15, 0
    %17 = vsyncpa [#allocation5], 0
    %s18 = scalar_lea.sflag [#allocation5], 1
    %19 = vsyncpa %s18, 0
    loop: start=0, step=1, limit=4
    $region2: #{tpu_custom_call.1} parent=1 // loop_pre_header
      _
    $region3: #{tpu_custom_call.1} parent=1 // loop_header
      %s21 = sphi 0, %s25
      %p22 = scmp.ge.s32.totalorder %s21, 4
      %s28 = sphi 0, %s40
      %s29 = sphi 0, %s36
      %s30 = sphi 0, %s28
      %s31 = sphi 0, %s29
      %s32 = sphi 0, %s30
      %s33 = sphi 0, %s31
      %s45 = sphi 0, %s47
      %s48 = sphi 0, %s45
      %s49 = sphi 0, %s48
      %s65 = sphi 0, %s49
      %s69 = sphi 0, %s69
      %s71 = sphi 0, %s69
      %s72 = sphi 0, %s71
      %s86 = sphi 0, %s72
      %s90 = sphi 0, %s90
      %s92 = sphi 0, %s90
      %s93 = sphi 0, %s92
      %s107 = sphi 0, %s93
      %s111 = sphi 0, %s111
      %s113 = sphi 0, %s111
      %s114 = sphi 0, %s113
      %s128 = sphi 0, %s114
      %s132 = sphi 0, %s132
      %s134 = sphi 0, %s132
      %s135 = sphi 0, %s134
      %s149 = sphi 0, %s135
      %s153 = sphi 0, %s153
      %s155 = sphi 0, %s153
      %s156 = sphi 0, %s155
      %s170 = sphi 0, %s156
      %s174 = sphi 0, %s174
      %s176 = sphi 0, %s174
      %s177 = sphi 0, %s176
      %s191 = sphi 0, %s177
      %s199 = sphi 0, %s201
      %s202 = sphi 0, %s199
      %s203 = sphi 0, %s202
      %s219 = sphi 0, %s203
    $region4: #{tpu_custom_call.1} parent=1 // loop_header_branch
      %24 = sbr.rel (%p22) target = $region8
    $region5: #{tpu_custom_call.1} parent=1 // loop_body
      %s26 = ssub.s32 %s21, 1
      %s27 = ssub.s32 %s21, 2
      %s34 = sadd.s32 1, %s29
      %p35 = scmp.ge.s32.totalorder %s34, 1
      %s36 = scalar_select %p35, 0, %s34
      %s37 = sadd.s32 1, %s28
      %s38 = scalar_select %p35, %s37, %s28
      %p39 = scmp.ge.s32.totalorder %s38, 2
      %s40 = scalar_select %p39, 0, %s38
      %s41 = ssub.s32 %s28, %s40
      %s42 = ssub.s32 %s29, %s36
      %s43 = sor.u32 %s41, %s42
      %p44 = scmp.eq.s32.totalorder %s43, 0
      %s46 = sadd.s32 %s45, 1
      %s47 = scalar_select %p44, %s45, %s46
      %p50 = pneg %p44
      %p51 = scmp.eq.s32.totalorder %s21, 1
      %p52 = por %p50, %p51
      %p53 = scmp.ne.s32.totalorder %s45, %s48
      %p54 = scmp.eq.s32.totalorder %s21, 0
      %p55 = por %p53, %p54
      %p56 = scmp.ne.s32.totalorder %s45, %s48
      %p57 = scmp.eq.s32.totalorder %s26, 1
      %p58 = por %p56, %p57
      %p59 = scmp.ne.s32.totalorder %s48, %s49
      %p60 = scmp.eq.s32.totalorder %s26, 0
      %p61 = por %p59, %p60
      %p62 = scmp.ne.s32.totalorder %s48, %s49
      %p63 = scmp.eq.s32.totalorder %s27, 1
      %p64 = por %p62, %p63
      %p66 = scmp.ne.s32.totalorder %s49, %s65
      %p67 = scmp.eq.s32.totalorder %s27, 0
      %p68 = por %p66, %p67
      %s70 = sadd.s32 %s69, 1
      %p73 = scmp.eq.s32.totalorder %s21, 1
      %p74 = scmp.ne.s32.totalorder %s69, %s71
      %p75 = scmp.eq.s32.totalorder %s21, 0
      %p76 = por %p74, %p75
      %p77 = scmp.ne.s32.totalorder %s69, %s71
      %p78 = scmp.eq.s32.totalorder %s26, 1
      %p79 = por %p77, %p78
      %p80 = scmp.ne.s32.totalorder %s71, %s72
      %p81 = scmp.eq.s32.totalorder %s26, 0
      %p82 = por %p80, %p81
      %p83 = scmp.ne.s32.totalorder %s71, %s72
      %p84 = scmp.eq.s32.totalorder %s27, 1
      %p85 = por %p83, %p84
      %p87 = scmp.ne.s32.totalorder %s72, %s86
      %p88 = scmp.eq.s32.totalorder %s27, 0
      %p89 = por %p87, %p88
      %s91 = sadd.s32 %s90, 1
      %p94 = scmp.eq.s32.totalorder %s21, 1
      %p95 = scmp.ne.s32.totalorder %s90, %s92
      %p96 = scmp.eq.s32.totalorder %s21, 0
      %p97 = por %p95, %p96
      %p98 = scmp.ne.s32.totalorder %s90, %s92
      %p99 = scmp.eq.s32.totalorder %s26, 1
      %p100 = por %p98, %p99
      %p101 = scmp.ne.s32.totalorder %s92, %s93
      %p102 = scmp.eq.s32.totalorder %s26, 0
      %p103 = por %p101, %p102
      %p104 = scmp.ne.s32.totalorder %s92, %s93
      %p105 = scmp.eq.s32.totalorder %s27, 1
      %p106 = por %p104, %p105
      %p108 = scmp.ne.s32.totalorder %s93, %s107
      %p109 = scmp.eq.s32.totalorder %s27, 0
      %p110 = por %p108, %p109
      %s112 = sadd.s32 %s111, 1
      %p115 = scmp.eq.s32.totalorder %s21, 1
      %p116 = scmp.ne.s32.totalorder %s111, %s113
      %p117 = scmp.eq.s32.totalorder %s21, 0
      %p118 = por %p116, %p117
      %p119 = scmp.ne.s32.totalorder %s111, %s113
      %p120 = scmp.eq.s32.totalorder %s26, 1
      %p121 = por %p119, %p120
      %p122 = scmp.ne.s32.totalorder %s113, %s114
      %p123 = scmp.eq.s32.totalorder %s26, 0
      %p124 = por %p122, %p123
      %p125 = scmp.ne.s32.totalorder %s113, %s114
      %p126 = scmp.eq.s32.totalorder %s27, 1
      %p127 = por %p125, %p126
      %p129 = scmp.ne.s32.totalorder %s114, %s128
      %p130 = scmp.eq.s32.totalorder %s27, 0
      %p131 = por %p129, %p130
      %s133 = sadd.s32 %s132, 1
      %p136 = scmp.eq.s32.totalorder %s21, 1
      %p137 = scmp.ne.s32.totalorder %s132, %s134
      %p138 = scmp.eq.s32.totalorder %s21, 0
      %p139 = por %p137, %p138
      %p140 = scmp.ne.s32.totalorder %s132, %s134
      %p141 = scmp.eq.s32.totalorder %s26, 1
      %p142 = por %p140, %p141
      %p143 = scmp.ne.s32.totalorder %s134, %s135
      %p144 = scmp.eq.s32.totalorder %s26, 0
      %p145 = por %p143, %p144
      %p146 = scmp.ne.s32.totalorder %s134, %s135
      %p147 = scmp.eq.s32.totalorder %s27, 1
      %p148 = por %p146, %p147
      %p150 = scmp.ne.s32.totalorder %s135, %s149
      %p151 = scmp.eq.s32.totalorder %s27, 0
      %p152 = por %p150, %p151
      %s154 = sadd.s32 %s153, 1
      %p157 = scmp.eq.s32.totalorder %s21, 1
      %p158 = scmp.ne.s32.totalorder %s153, %s155
      %p159 = scmp.eq.s32.totalorder %s21, 0
      %p160 = por %p158, %p159
      %p161 = scmp.ne.s32.totalorder %s153, %s155
      %p162 = scmp.eq.s32.totalorder %s26, 1
      %p163 = por %p161, %p162
      %p164 = scmp.ne.s32.totalorder %s155, %s156
      %p165 = scmp.eq.s32.totalorder %s26, 0
      %p166 = por %p164, %p165
      %p167 = scmp.ne.s32.totalorder %s155, %s156
      %p168 = scmp.eq.s32.totalorder %s27, 1
      %p169 = por %p167, %p168
      %p171 = scmp.ne.s32.totalorder %s156, %s170
      %p172 = scmp.eq.s32.totalorder %s27, 0
      %p173 = por %p171, %p172
      %s175 = sadd.s32 %s174, 1
      %p178 = scmp.eq.s32.totalorder %s21, 1
      %p179 = scmp.ne.s32.totalorder %s174, %s176
      %p180 = scmp.eq.s32.totalorder %s21, 0
      %p181 = por %p179, %p180
      %p182 = scmp.ne.s32.totalorder %s174, %s176
      %p183 = scmp.eq.s32.totalorder %s26, 1
      %p184 = por %p182, %p183
      %p185 = scmp.ne.s32.totalorder %s176, %s177
      %p186 = scmp.eq.s32.totalorder %s26, 0
      %p187 = por %p185, %p186
      %p188 = scmp.ne.s32.totalorder %s176, %s177
      %p189 = scmp.eq.s32.totalorder %s27, 1
      %p190 = por %p188, %p189
      %p192 = scmp.ne.s32.totalorder %s177, %s191
      %p193 = scmp.eq.s32.totalorder %s27, 0
      %p194 = por %p192, %p193
      %s195 = ssub.s32 %s28, %s40
      %s196 = ssub.s32 %s29, %s36
      %s197 = sor.u32 %s195, %s196
      %p198 = scmp.eq.s32.totalorder %s197, 0
      %s200 = sadd.s32 %s199, 1
      %s201 = scalar_select %p198, %s199, %s200
      %p204 = pneg %p198
      %p205 = scmp.eq.s32.totalorder %s21, 1
      %p206 = por %p204, %p205
      %p207 = scmp.ne.s32.totalorder %s199, %s202
      %p208 = scmp.eq.s32.totalorder %s21, 0
      %p209 = por %p207, %p208
      %p210 = scmp.ne.s32.totalorder %s199, %s202
      %p211 = scmp.eq.s32.totalorder %s26, 1
      %p212 = por %p210, %p211
      %p213 = scmp.ne.s32.totalorder %s202, %s203
      %p214 = scmp.eq.s32.totalorder %s26, 0
      %p215 = por %p213, %p214
      %p216 = scmp.ne.s32.totalorder %s202, %s203
      %p217 = scmp.eq.s32.totalorder %s27, 1
      %p218 = por %p216, %p217
      %p220 = scmp.ne.s32.totalorder %s203, %s219
      %p221 = scmp.eq.s32.totalorder %s27, 0
      %p222 = por %p220, %p221
      %p223 = scmp.le.s32.totalorder 1, %s21
      %p224 = scmp.lt.s32.totalorder %s21, 3
      %p225 = pnand %p223, %p224
      %p226 = pneg %p225
      // Predicated region
      $region9: #{tpu_custom_call.1} parent=5 // pred_check
        _
      $region10: #{tpu_custom_call.1} parent=5 // pred_check_branch
        %228 = sbr.rel (%p225) target = $region12
      $region11: #{tpu_custom_call.1} parent=5 // pred_region
        %s229 = ssub.s32 %s21, 1
        // Predicated region
        $region13: #{tpu_custom_call.1} parent=11 // pred_check
          %p230 = pneg %p82
        $region14: #{tpu_custom_call.1} parent=11 // pred_check_branch
          %232 = sbr.rel (%p230) target = $region16
        $region15: #{tpu_custom_call.1} parent=11 // pred_region
          _
        $region16: #{tpu_custom_call.1} parent=11 // pred_fallthru
          _
        // Predicated region
        $region17: #{tpu_custom_call.1} parent=11 // pred_check
          %p233 = pneg %p103
        $region18: #{tpu_custom_call.1} parent=11 // pred_check_branch
          %235 = sbr.rel (%p233) target = $region20
        $region19: #{tpu_custom_call.1} parent=11 // pred_region
          _
        $region20: #{tpu_custom_call.1} parent=11 // pred_fallthru
          _
        // Predicated region
        $region21: #{tpu_custom_call.1} parent=11 // pred_check
          %p236 = pneg %p124
        $region22: #{tpu_custom_call.1} parent=11 // pred_check_branch
          %238 = sbr.rel (%p236) target = $region24
        $region23: #{tpu_custom_call.1} parent=11 // pred_region
          _
        $region24: #{tpu_custom_call.1} parent=11 // pred_fallthru
          _
        // Predicated region
        $region25: #{tpu_custom_call.1} parent=11 // pred_check
          %p239 = pneg %p145
        $region26: #{tpu_custom_call.1} parent=11 // pred_check_branch
          %241 = sbr.rel (%p239) target = $region28
        $region27: #{tpu_custom_call.1} parent=11 // pred_region
          _
        $region28: #{tpu_custom_call.1} parent=11 // pred_fallthru
          _
        // Predicated region
        $region29: #{tpu_custom_call.1} parent=11 // pred_check
          %p242 = pneg %p166
        $region30: #{tpu_custom_call.1} parent=11 // pred_check_branch
          %244 = sbr.rel (%p242) target = $region32
        $region31: #{tpu_custom_call.1} parent=11 // pred_region
          _
        $region32: #{tpu_custom_call.1} parent=11 // pred_fallthru
          _
        // Predicated region
        $region33: #{tpu_custom_call.1} parent=11 // pred_check
          %p245 = pneg %p187
        $region34: #{tpu_custom_call.1} parent=11 // pred_check_branch
          %247 = sbr.rel (%p245) target = $region36
        $region35: #{tpu_custom_call.1} parent=11 // pred_region
          _
        $region36: #{tpu_custom_call.1} parent=11 // pred_fallthru
          _
      $region12: #{tpu_custom_call.1} parent=5 // pred_fallthru
        _
      %p248 = scmp.lt.s32.totalorder %s21, 2
      // Predicated region
      $region37: #{tpu_custom_call.1} parent=5 // pred_check
        %p249 = pneg %p248
      $region38: #{tpu_custom_call.1} parent=5 // pred_check_branch
        %251 = sbr.rel (%p249) target = $region40
      $region39: #{tpu_custom_call.1} parent=5 // pred_region
        // Predicated region
        $region41: #{tpu_custom_call.1} parent=39 // pred_check
          %p252 = pneg %p55
        $region42: #{tpu_custom_call.1} parent=39 // pred_check_branch
          %254 = sbr.rel (%p252) target = $region44
        $region43: #{tpu_custom_call.1} parent=39 // pred_region
          %s255 = sand.u32 %s45, 1
          %s256 = scalar_lea.sflag [#allocation4], %s255
          %s257 = sand.u32 %s45, 1
          %s258 = smul.addr %s257, 512
          %s259 = scalar_lea.vmem [#allocation3], %s258
          %s260 = smul.u32 2, %s29
          %s262 = ssub.s32 8192, 8192
          %263 = vsyncadd %s256, %s262
          %s264 = smul.addr %s28, 64
          %s265 = sadd.s32 %s260, %s264
          %s266 = smul.addr %s265, 128
          %s267 = scalar_lea.hbm %s0, %s266
          %s268 = sshll.u32 %s259, 4
          %s269 = int_to_ptr.vmem [resolvable:$true] %s268
          %274 = dma.hbm_to_vmem [thread:$0]  %s267, 8192, %s269, %s256, 256, 256, 16
        $region44: #{tpu_custom_call.1} parent=39 // pred_fallthru
          _
      $region40: #{tpu_custom_call.1} parent=5 // pred_fallthru
        _
      %p275 = scmp.le.s32.totalorder 1, %s21
      %p276 = scmp.lt.s32.totalorder %s21, 3
      %p277 = pnand %p275, %p276
      %p278 = pneg %p277
      // Predicated region
      $region45: #{tpu_custom_call.1} parent=5 // pred_check
        _
      $region46: #{tpu_custom_call.1} parent=5 // pred_check_branch
        %280 = sbr.rel (%p277) target = $region48
      $region47: #{tpu_custom_call.1} parent=5 // pred_region
        %s281 = ssub.s32 %s21, 1
        %s282 = sand.u32 %s48, 1
        %s283 = scalar_lea.sflag [#allocation4], %s282
        %s284 = sand.u32 %s48, 1
        %s285 = smul.addr %s284, 512
        %s286 = scalar_lea.vmem [#allocation3], %s285
        // Predicated region
        $region49: #{tpu_custom_call.1} parent=47 // pred_check
          %p287 = pneg %p61
        $region50: #{tpu_custom_call.1} parent=47 // pred_check_branch
          %289 = sbr.rel (%p287) target = $region52
        $region51: #{tpu_custom_call.1} parent=47 // pred_region
          %290 = dma.done %s283, 8192
        $region52: #{tpu_custom_call.1} parent=47 // pred_fallthru
          _
        %s291 = sand.u32 %s48, 1
        %s292 = scalar_lea.sflag [#allocation4], %s291
        %s293 = sand.u32 %s48, 1
        %s294 = smul.addr %s293, 512
        %s295 = scalar_lea.vmem [#allocation3], %s294
        %p296 = pneg %p61
        %p297 = pneg %p58
        %p298 = pneg %p82
        %p299 = pneg %p79
        %p300 = pneg %p103
        %p301 = pneg %p100
        %p302 = pneg %p124
        %p303 = pneg %p121
        %p304 = pneg %p145
        %p305 = pneg %p142
        %p306 = pneg %p166
        %p307 = pneg %p163
        %p308 = pneg %p187
        %p309 = pneg %p184
        %p310 = pneg %p215
        %p311 = pneg %p212
        %s312 = sand.u32 %s202, 1
        %s313 = scalar_lea.sflag [#allocation5], %s312
        %s314 = sand.u32 %s202, 1
        %s315 = smul.addr %s314, 2
        %s316 = scalar_lea.vmem [#allocation6], %s315
        %s317 = smul.u32 2, %s31
        %s318 = smul.u32 2, %s31
        %v320 = vld [vmem:[%s286] sm:$0xff]
        %v321 = vld [vmem:[%s286 + $0x8] sm:$0xff]
        %v322 = vld [vmem:[%s286 + $0x10] sm:$0xff]
        %v323 = vld [vmem:[%s286 + $0x18] sm:$0xff]
        %v324 = vld [vmem:[%s286 + $0x20] sm:$0xff]
        %v325 = vld [vmem:[%s286 + $0x28] sm:$0xff]
        %v326 = vld [vmem:[%s286 + $0x30] sm:$0xff]
        %v327 = vld [vmem:[%s286 + $0x38] sm:$0xff]
        %v328 = vld [vmem:[%s286 + $0x40] sm:$0xff]
        %v329 = vld [vmem:[%s286 + $0x48] sm:$0xff]
        %v330 = vld [vmem:[%s286 + $0x50] sm:$0xff]
        %v331 = vld [vmem:[%s286 + $0x58] sm:$0xff]
        %v332 = vld [vmem:[%s286 + $0x60] sm:$0xff]
        %v333 = vld [vmem:[%s286 + $0x68] sm:$0xff]
        %v334 = vld [vmem:[%s286 + $0x70] sm:$0xff]
        %v335 = vld [vmem:[%s286 + $0x78] sm:$0xff]
        %v336 = vld [vmem:[%s286 + $0x80] sm:$0xff]
        %v337 = vld [vmem:[%s286 + $0x88] sm:$0xff]
        %v338 = vld [vmem:[%s286 + $0x90] sm:$0xff]
        %v339 = vld [vmem:[%s286 + $0x98] sm:$0xff]
        %v340 = vld [vmem:[%s286 + $0xa0] sm:$0xff]
        %v341 = vld [vmem:[%s286 + $0xa8] sm:$0xff]
        %v342 = vld [vmem:[%s286 + $0xb0] sm:$0xff]
        %v343 = vld [vmem:[%s286 + $0xb8] sm:$0xff]
        %v344 = vld [vmem:[%s286 + $0xc0] sm:$0xff]
        %v345 = vld [vmem:[%s286 + $0xc8] sm:$0xff]
        %v346 = vld [vmem:[%s286 + $0xd0] sm:$0xff]
        %v347 = vld [vmem:[%s286 + $0xd8] sm:$0xff]
        %v348 = vld [vmem:[%s286 + $0xe0] sm:$0xff]
        %v349 = vld [vmem:[%s286 + $0xe8] sm:$0xff]
        %v350 = vld [vmem:[%s286 + $0xf0] sm:$0xff]
        %v351 = vld [vmem:[%s286 + $0xf8] sm:$0xff]
        %v352 = vld [vmem:[%s286 + $0x100] sm:$0xff]
        %v353 = vld [vmem:[%s286 + $0x108] sm:$0xff]
        %v354 = vld [vmem:[%s286 + $0x110] sm:$0xff]
        %v355 = vld [vmem:[%s286 + $0x118] sm:$0xff]
        %v356 = vld [vmem:[%s286 + $0x120] sm:$0xff]
        %v357 = vld [vmem:[%s286 + $0x128] sm:$0xff]
        %v358 = vld [vmem:[%s286 + $0x130] sm:$0xff]
        %v359 = vld [vmem:[%s286 + $0x138] sm:$0xff]
        %v360 = vld [vmem:[%s286 + $0x140] sm:$0xff]
        %v361 = vld [vmem:[%s286 + $0x148] sm:$0xff]
        %v362 = vld [vmem:[%s286 + $0x150] sm:$0xff]
        %v363 = vld [vmem:[%s286 + $0x158] sm:$0xff]
        %v364 = vld [vmem:[%s286 + $0x160] sm:$0xff]
        %v365 = vld [vmem:[%s286 + $0x168] sm:$0xff]
        %v366 = vld [vmem:[%s286 + $0x170] sm:$0xff]
        %v367 = vld [vmem:[%s286 + $0x178] sm:$0xff]
        %v368 = vld [vmem:[%s286 + $0x180] sm:$0xff]
        %v369 = vld [vmem:[%s286 + $0x188] sm:$0xff]
        %v370 = vld [vmem:[%s286 + $0x190] sm:$0xff]
        %v371 = vld [vmem:[%s286 + $0x198] sm:$0xff]
        %v372 = vld [vmem:[%s286 + $0x1a0] sm:$0xff]
        %v373 = vld [vmem:[%s286 + $0x1a8] sm:$0xff]
        %v374 = vld [vmem:[%s286 + $0x1b0] sm:$0xff]
        %v375 = vld [vmem:[%s286 + $0x1b8] sm:$0xff]
        %v376 = vld [vmem:[%s286 + $0x1c0] sm:$0xff]
        %v377 = vld [vmem:[%s286 + $0x1c8] sm:$0xff]
        %v378 = vld [vmem:[%s286 + $0x1d0] sm:$0xff]
        %v379 = vld [vmem:[%s286 + $0x1d8] sm:$0xff]
        %v380 = vld [vmem:[%s286 + $0x1e0] sm:$0xff]
        %v381 = vld [vmem:[%s286 + $0x1e8] sm:$0xff]
        %v382 = vld [vmem:[%s286 + $0x1f0] sm:$0xff]
        %v383 = vld [vmem:[%s286 + $0x1f8] sm:$0xff]
        %v384 = vpack.c.bf16 %v322, %v320
        %v385 = vpack.c.bf16 %v323, %v321
        %v386 = vpack.c.bf16 %v326, %v324
        %v387 = vpack.c.bf16 %v327, %v325
        %v388 = vpack.c.bf16 %v330, %v328
        %v389 = vpack.c.bf16 %v331, %v329
        %v390 = vpack.c.bf16 %v334, %v332
        %v391 = vpack.c.bf16 %v335, %v333
        %v392 = vpack.c.bf16 %v338, %v336
        %v393 = vpack.c.bf16 %v339, %v337
        %v394 = vpack.c.bf16 %v342, %v340
        %v395 = vpack.c.bf16 %v343, %v341
        %v396 = vpack.c.bf16 %v346, %v344
        %v397 = vpack.c.bf16 %v347, %v345
        %v398 = vpack.c.bf16 %v350, %v348
        %v399 = vpack.c.bf16 %v351, %v349
        %v400 = vpack.c.bf16 %v354, %v352
        %v401 = vpack.c.bf16 %v355, %v353
        %v402 = vpack.c.bf16 %v358, %v356
        %v403 = vpack.c.bf16 %v359, %v357
        %v404 = vpack.c.bf16 %v362, %v360
        %v405 = vpack.c.bf16 %v363, %v361
        %v406 = vpack.c.bf16 %v366, %v364
        %v407 = vpack.c.bf16 %v367, %v365
        %v408 = vpack.c.bf16 %v370, %v368
        %v409 = vpack.c.bf16 %v371, %v369
        %v410 = vpack.c.bf16 %v374, %v372
        %v411 = vpack.c.bf16 %v375, %v373
        %v412 = vpack.c.bf16 %v378, %v376
        %v413 = vpack.c.bf16 %v379, %v377
        %v414 = vpack.c.bf16 %v382, %v380
        %v415 = vpack.c.bf16 %v383, %v381
        %v416 = vld [vmem:[%s1] sm:$0xff]
        %v417 = vld [vmem:[%s1 + $0x8] sm:$0xff]
        %v418 = vld [vmem:[%s1 + $0x10] sm:$0xff]
        %v419 = vld [vmem:[%s1 + $0x18] sm:$0xff]
        %v420 = vld [vmem:[%s1 + $0x20] sm:$0xff]
        %v421 = vld [vmem:[%s1 + $0x28] sm:$0xff]
        %v422 = vld [vmem:[%s1 + $0x30] sm:$0xff]
        %v423 = vld [vmem:[%s1 + $0x38] sm:$0xff]
        %v424 = vld [vmem:[%s1 + $0x40] sm:$0xff]
        %v425 = vld [vmem:[%s1 + $0x48] sm:$0xff]
        %v426 = vld [vmem:[%s1 + $0x50] sm:$0xff]
        %v427 = vld [vmem:[%s1 + $0x58] sm:$0xff]
        %v428 = vld [vmem:[%s1 + $0x60] sm:$0xff]
        %v429 = vld [vmem:[%s1 + $0x68] sm:$0xff]
        %v430 = vld [vmem:[%s1 + $0x70] sm:$0xff]
        %v431 = vld [vmem:[%s1 + $0x78] sm:$0xff]
        %v432 = vld [vmem:[%s2] sm:$0xff]
        %v433 = vld [vmem:[%s2 + $0x8] sm:$0xff]
        %v434 = vld [vmem:[%s2 + $0x10] sm:$0xff]
        %v435 = vld [vmem:[%s2 + $0x18] sm:$0xff]
        %v436 = vld [vmem:[%s2 + $0x20] sm:$0xff]
        %v437 = vld [vmem:[%s2 + $0x28] sm:$0xff]
        %v438 = vld [vmem:[%s2 + $0x30] sm:$0xff]
        %v439 = vld [vmem:[%s2 + $0x38] sm:$0xff]
        %v440 = vld [vmem:[%s2 + $0x40] sm:$0xff]
        %v441 = vld [vmem:[%s2 + $0x48] sm:$0xff]
        %v442 = vld [vmem:[%s2 + $0x50] sm:$0xff]
        %v443 = vld [vmem:[%s2 + $0x58] sm:$0xff]
        %v444 = vld [vmem:[%s2 + $0x60] sm:$0xff]
        %v445 = vld [vmem:[%s2 + $0x68] sm:$0xff]
        %v446 = vld [vmem:[%s2 + $0x70] sm:$0xff]
        %v447 = vld [vmem:[%s2 + $0x78] sm:$0xff]
        %449 = vset.pattern.permute.xlu0 0
        %450 = vperm.xlu0 %449, %v432
        %v451 = vpop.permute.xlu0 %450
        %454 = vset.pattern.permute.xlu0 0
        %455 = vperm.xlu0 %454, %v433
        %v456 = vpop.permute.xlu0 %455
        %459 = vset.pattern.permute.xlu0 0
        %460 = vperm.xlu0 %459, %v434
        %v461 = vpop.permute.xlu0 %460
        %464 = vset.pattern.permute.xlu0 0
        %465 = vperm.xlu0 %464, %v435
        %v466 = vpop.permute.xlu0 %465
        %469 = vset.pattern.permute.xlu0 0
        %470 = vperm.xlu0 %469, %v436
        %v471 = vpop.permute.xlu0 %470
        %474 = vset.pattern.permute.xlu0 0
        %475 = vperm.xlu0 %474, %v437
        %v476 = vpop.permute.xlu0 %475
        %479 = vset.pattern.permute.xlu0 0
        %480 = vperm.xlu0 %479, %v438
        %v481 = vpop.permute.xlu0 %480
        %484 = vset.pattern.permute.xlu0 0
        %485 = vperm.xlu0 %484, %v439
        %v486 = vpop.permute.xlu0 %485
        %489 = vset.pattern.permute.xlu0 0
        %490 = vperm.xlu0 %489, %v440
        %v491 = vpop.permute.xlu0 %490
        %494 = vset.pattern.permute.xlu0 0
        %495 = vperm.xlu0 %494, %v441
        %v496 = vpop.permute.xlu0 %495
        %499 = vset.pattern.permute.xlu0 0
        %500 = vperm.xlu0 %499, %v442
        %v501 = vpop.permute.xlu0 %500
        %504 = vset.pattern.permute.xlu0 0
        %505 = vperm.xlu0 %504, %v443
        %v506 = vpop.permute.xlu0 %505
        %509 = vset.pattern.permute.xlu0 0
        %510 = vperm.xlu0 %509, %v444
        %v511 = vpop.permute.xlu0 %510
        %514 = vset.pattern.permute.xlu0 0
        %515 = vperm.xlu0 %514, %v445
        %v516 = vpop.permute.xlu0 %515
        %519 = vset.pattern.permute.xlu0 0
        %520 = vperm.xlu0 %519, %v446
        %v521 = vpop.permute.xlu0 %520
        %524 = vset.pattern.permute.xlu0 0
        %525 = vperm.xlu0 %524, %v447
        %v526 = vpop.permute.xlu0 %525
        %v544 = vunpack.c.l.b16 %v416
        %v545 = vunpack.c.h.b16 %v416
        %v546 = vunpack.c.l.b16 %v417
        %v547 = vunpack.c.h.b16 %v417
        %v548 = vunpack.c.l.b16 %v418
        %v549 = vunpack.c.h.b16 %v418
        %v550 = vunpack.c.l.b16 %v419
        %v551 = vunpack.c.h.b16 %v419
        %v552 = vunpack.c.l.b16 %v420
        %v553 = vunpack.c.h.b16 %v420
        %v554 = vunpack.c.l.b16 %v421
        %v555 = vunpack.c.h.b16 %v421
        %v556 = vunpack.c.l.b16 %v422
        %v557 = vunpack.c.h.b16 %v422
        %v558 = vunpack.c.l.b16 %v423
        %v559 = vunpack.c.h.b16 %v423
        %v560 = vunpack.c.l.b16 %v424
        %v561 = vunpack.c.h.b16 %v424
        %v562 = vunpack.c.l.b16 %v425
        %v563 = vunpack.c.h.b16 %v425
        %v564 = vunpack.c.l.b16 %v426
        %v565 = vunpack.c.h.b16 %v426
        %v566 = vunpack.c.l.b16 %v427
        %v567 = vunpack.c.h.b16 %v427
        %v568 = vunpack.c.l.b16 %v428
        %v569 = vunpack.c.h.b16 %v428
        %v570 = vunpack.c.l.b16 %v429
        %v571 = vunpack.c.h.b16 %v429
        %v572 = vunpack.c.l.b16 %v430
        %v573 = vunpack.c.h.b16 %v430
        %v574 = vunpack.c.l.b16 %v431
        %v575 = vunpack.c.h.b16 %v431
        %v576 = vpack.c.b16 %v546, %v544
        %v577 = vpack.c.b16 %v547, %v545
        %v578 = vpack.c.b16 %v550, %v548
        %v579 = vpack.c.b16 %v551, %v549
        %v580 = vpack.c.b16 %v554, %v552
        %v581 = vpack.c.b16 %v555, %v553
        %v582 = vpack.c.b16 %v558, %v556
        %v583 = vpack.c.b16 %v559, %v557
        %v584 = vpack.c.b16 %v562, %v560
        %v585 = vpack.c.b16 %v563, %v561
        %v586 = vpack.c.b16 %v566, %v564
        %v587 = vpack.c.b16 %v567, %v565
        %v588 = vpack.c.b16 %v570, %v568
        %v589 = vpack.c.b16 %v571, %v569
        %v590 = vpack.c.b16 %v574, %v572
        %v591 = vpack.c.b16 %v575, %v573
        %608 = vmatprep.subr.bf16.mxu0 %v385
        %609 = vmatpush1.bf16.msra.mxu0 %v384
        %610 = vmatprep.subr.bf16.mxu0 %v387
        %611 = vmatpush1.bf16.msra.mxu0 %v386
        %612 = vmatprep.subr.bf16.mxu0 %v389
        %613 = vmatpush1.bf16.msra.mxu0 %v388
        %614 = vmatprep.subr.bf16.mxu0 %v391
        %615 = vmatpush1.bf16.msra.mxu0 %v390
        %616 = vmatprep.subr.bf16.mxu0 %v393
        %617 = vmatpush1.bf16.msra.mxu0 %v392
        %618 = vmatprep.subr.bf16.mxu0 %v395
        %619 = vmatpush1.bf16.msra.mxu0 %v394
        %620 = vmatprep.subr.bf16.mxu0 %v397
        %621 = vmatpush1.bf16.msra.mxu0 %v396
        %622 = vmatprep.subr.bf16.mxu0 %v399
        %623 = vmatpush1.bf16.msra.mxu0 %v398
        %624 = vmatprep.subr.bf16.mxu0 %v401
        %625 = vmatpush1.bf16.msra.mxu0 %v400
        %626 = vmatprep.subr.bf16.mxu0 %v403
        %627 = vmatpush1.bf16.msra.mxu0 %v402
        %628 = vmatprep.subr.bf16.mxu0 %v405
        %629 = vmatpush1.bf16.msra.mxu0 %v404
        %630 = vmatprep.subr.bf16.mxu0 %v407
        %631 = vmatpush1.bf16.msra.mxu0 %v406
        %632 = vmatprep.subr.bf16.mxu0 %v409
        %633 = vmatpush1.bf16.msra.mxu0 %v408
        %634 = vmatprep.subr.bf16.mxu0 %v411
        %635 = vmatpush1.bf16.msra.mxu0 %v410
        %636 = vmatprep.subr.bf16.mxu0 %v413
        %637 = vmatpush1.bf16.msra.mxu0 %v412
        %638 = vmatprep.subr.bf16.mxu0 %v415
        %639 = vmatpush1.bf16.msra.mxu0 %v414
        %640 = vmatprep.mubr.bf16.mxu0 %v577
        %641 = vmatmul.mubr.bf16.gmra.mrb[0].mxu0 %v576
        %v642 = vpop.f32.mrb[0].mxu0
        %v643 = vadd.f32 %v451, %v642
        %v644 = vpop.f32.mrb[0].mxu0
        %v645 = vadd.f32 %v451, %v644
        %v646 = vpop.f32.mrb[0].mxu0
        %v647 = vadd.f32 %v456, %v646
        %v648 = vpop.f32.mrb[0].mxu0
        %v649 = vadd.f32 %v456, %v648
        %650 = vmatprep.mubr.bf16.mxu0 %v579
        %651 = vmatmul.mubr.bf16.gmra.mrb[0].mxu0 %v578
        %v652 = vpop.f32.mrb[0].mxu0
        %v653 = vadd.f32 %v461, %v652
        %v654 = vpop.f32.mrb[0].mxu0
        %v655 = vadd.f32 %v461, %v654
        %v656 = vpop.f32.mrb[0].mxu0
        %v657 = vadd.f32 %v466, %v656
        %v658 = vpop.f32.mrb[0].mxu0
        %v659 = vadd.f32 %v466, %v658
        %660 = vmatprep.mubr.bf16.mxu0 %v581
        %661 = vmatmul.mubr.bf16.gmra.mrb[0].mxu0 %v580
        %v662 = vpop.f32.mrb[0].mxu0
        %v663 = vadd.f32 %v471, %v662
        %v664 = vpop.f32.mrb[0].mxu0
        %v665 = vadd.f32 %v471, %v664
        %v666 = vpop.f32.mrb[0].mxu0
        %v667 = vadd.f32 %v476, %v666
        %v668 = vpop.f32.mrb[0].mxu0
        %v669 = vadd.f32 %v476, %v668
        %670 = vmatprep.mubr.bf16.mxu0 %v583
        %671 = vmatmul.mubr.bf16.gmra.mrb[0].mxu0 %v582
        %v672 = vpop.f32.mrb[0].mxu0
        %v673 = vadd.f32 %v481, %v672
        %v674 = vpop.f32.mrb[0].mxu0
        %v675 = vadd.f32 %v481, %v674
        %v676 = vpop.f32.mrb[0].mxu0
        %v677 = vadd.f32 %v486, %v676
        %v678 = vpop.f32.mrb[0].mxu0
        %v679 = vadd.f32 %v486, %v678
        %680 = vmatprep.mubr.bf16.mxu0 %v585
        %681 = vmatmul.mubr.bf16.gmra.mrb[0].mxu0 %v584
        %v682 = vpop.f32.mrb[0].mxu0
        %v683 = vadd.f32 %v491, %v682
        %v684 = vpop.f32.mrb[0].mxu0
        %v685 = vadd.f32 %v491, %v684
        %v686 = vpop.f32.mrb[0].mxu0
        %v687 = vadd.f32 %v496, %v686
        %v688 = vpop.f32.mrb[0].mxu0
        %v689 = vadd.f32 %v496, %v688
        %690 = vmatprep.mubr.bf16.mxu0 %v587
        %691 = vmatmul.mubr.bf16.gmra.mrb[0].mxu0 %v586
        %v692 = vpop.f32.mrb[0].mxu0
        %v693 = vadd.f32 %v501, %v692
        %v694 = vpop.f32.mrb[0].mxu0
        %v695 = vadd.f32 %v501, %v694
        %v696 = vpop.f32.mrb[0].mxu0
        %v697 = vadd.f32 %v506, %v696
        %v698 = vpop.f32.mrb[0].mxu0
        %v699 = vadd.f32 %v506, %v698
        %700 = vmatprep.mubr.bf16.mxu0 %v589
        %701 = vmatmul.mubr.bf16.gmra.mrb[0].mxu0 %v588
        %v702 = vpop.f32.mrb[0].mxu0
        %v703 = vadd.f32 %v511, %v702
        %v704 = vpop.f32.mrb[0].mxu0
        %v705 = vadd.f32 %v511, %v704
        %v706 = vpop.f32.mrb[0].mxu0
        %v707 = vadd.f32 %v516, %v706
        %v708 = vpop.f32.mrb[0].mxu0
        %v709 = vadd.f32 %v516, %v708
        %710 = vmatprep.mubr.bf16.mxu0 %v591
        %711 = vmatmul.mubr.bf16.gmra.mrb[0].mxu0 %v590
        %v712 = vpop.f32.mrb[0].mxu0
        %v713 = vadd.f32 %v521, %v712
        %v714 = vpop.f32.mrb[0].mxu0
        %v715 = vadd.f32 %v521, %v714
        %v716 = vpop.f32.mrb[0].mxu0
        %v717 = vadd.f32 %v526, %v716
        %v718 = vpop.f32.mrb[0].mxu0
        %v719 = vadd.f32 %v526, %v718
        %720 = vdwg.mxu0
        %vm721 = vcmp.gt.f32.partialorder %v643, 0.0
        %vm722 = vcmp.gt.f32.partialorder %v645, 0.0
        %vm723 = vcmp.gt.f32.partialorder %v647, 0.0
        %vm724 = vcmp.gt.f32.partialorder %v649, 0.0
        %vm725 = vcmp.gt.f32.partialorder %v653, 0.0
        %vm726 = vcmp.gt.f32.partialorder %v655, 0.0
        %vm727 = vcmp.gt.f32.partialorder %v657, 0.0
        %vm728 = vcmp.gt.f32.partialorder %v659, 0.0
        %vm729 = vcmp.gt.f32.partialorder %v663, 0.0
        %vm730 = vcmp.gt.f32.partialorder %v665, 0.0
        %vm731 = vcmp.gt.f32.partialorder %v667, 0.0
        %vm732 = vcmp.gt.f32.partialorder %v669, 0.0
        %vm733 = vcmp.gt.f32.partialorder %v673, 0.0
        %vm734 = vcmp.gt.f32.partialorder %v675, 0.0
        %vm735 = vcmp.gt.f32.partialorder %v677, 0.0
        %vm736 = vcmp.gt.f32.partialorder %v679, 0.0
        %vm737 = vcmp.gt.f32.partialorder %v683, 0.0
        %vm738 = vcmp.gt.f32.partialorder %v685, 0.0
        %vm739 = vcmp.gt.f32.partialorder %v687, 0.0
        %vm740 = vcmp.gt.f32.partialorder %v689, 0.0
        %vm741 = vcmp.gt.f32.partialorder %v693, 0.0
        %vm742 = vcmp.gt.f32.partialorder %v695, 0.0
        %vm743 = vcmp.gt.f32.partialorder %v697, 0.0
        %vm744 = vcmp.gt.f32.partialorder %v699, 0.0
        %vm745 = vcmp.gt.f32.partialorder %v703, 0.0
        %vm746 = vcmp.gt.f32.partialorder %v705, 0.0
        %vm747 = vcmp.gt.f32.partialorder %v707, 0.0
        %vm748 = vcmp.gt.f32.partialorder %v709, 0.0
        %vm749 = vcmp.gt.f32.partialorder %v713, 0.0
        %vm750 = vcmp.gt.f32.partialorder %v715, 0.0
        %vm751 = vcmp.gt.f32.partialorder %v717, 0.0
        %vm752 = vcmp.gt.f32.partialorder %v719, 0.0
        %v753 = vmul.f32 %v643, 0.2
        %v754 = vmul.f32 %v645, 0.2
        %v755 = vmul.f32 %v647, 0.2
        %v756 = vmul.f32 %v649, 0.2
        %v757 = vmul.f32 %v653, 0.2
        %v758 = vmul.f32 %v655, 0.2
        %v759 = vmul.f32 %v657, 0.2
        %v760 = vmul.f32 %v659, 0.2
        %v761 = vmul.f32 %v663, 0.2
        %v762 = vmul.f32 %v665, 0.2
        %v763 = vmul.f32 %v667, 0.2
        %v764 = vmul.f32 %v669, 0.2
        %v765 = vmul.f32 %v673, 0.2
        %v766 = vmul.f32 %v675, 0.2
        %v767 = vmul.f32 %v677, 0.2
        %v768 = vmul.f32 %v679, 0.2
        %v769 = vmul.f32 %v683, 0.2
        %v770 = vmul.f32 %v685, 0.2
        %v771 = vmul.f32 %v687, 0.2
        %v772 = vmul.f32 %v689, 0.2
        %v773 = vmul.f32 %v693, 0.2
        %v774 = vmul.f32 %v695, 0.2
        %v775 = vmul.f32 %v697, 0.2
        %v776 = vmul.f32 %v699, 0.2
        %v777 = vmul.f32 %v703, 0.2
        %v778 = vmul.f32 %v705, 0.2
        %v779 = vmul.f32 %v707, 0.2
        %v780 = vmul.f32 %v709, 0.2
        %v781 = vmul.f32 %v713, 0.2
        %v782 = vmul.f32 %v715, 0.2
        %v783 = vmul.f32 %v717, 0.2
        %v784 = vmul.f32 %v719, 0.2
        %v785 = vsel %vm721, %v643, %v753
        %v786 = vsel %vm722, %v645, %v754
        %v787 = vsel %vm723, %v647, %v755
        %v788 = vsel %vm724, %v649, %v756
        %v789 = vsel %vm725, %v653, %v757
        %v790 = vsel %vm726, %v655, %v758
        %v791 = vsel %vm727, %v657, %v759
        %v792 = vsel %vm728, %v659, %v760
        %v793 = vsel %vm729, %v663, %v761
        %v794 = vsel %vm730, %v665, %v762
        %v795 = vsel %vm731, %v667, %v763
        %v796 = vsel %vm732, %v669, %v764
        %v797 = vsel %vm733, %v673, %v765
        %v798 = vsel %vm734, %v675, %v766
        %v799 = vsel %vm735, %v677, %v767
        %v800 = vsel %vm736, %v679, %v768
        %v801 = vsel %vm737, %v683, %v769
        %v802 = vsel %vm738, %v685, %v770
        %v803 = vsel %vm739, %v687, %v771
        %v804 = vsel %vm740, %v689, %v772
        %v805 = vsel %vm741, %v693, %v773
        %v806 = vsel %vm742, %v695, %v774
        %v807 = vsel %vm743, %v697, %v775
        %v808 = vsel %vm744, %v699, %v776
        %v809 = vsel %vm745, %v703, %v777
        %v810 = vsel %vm746, %v705, %v778
        %v811 = vsel %vm747, %v707, %v779
        %v812 = vsel %vm748, %v709, %v780
        %v813 = vsel %vm749, %v713, %v781
        %v814 = vsel %vm750, %v715, %v782
        %v815 = vsel %vm751, %v717, %v783
        %v816 = vsel %vm752, %v719, %v784
        %v817 = vld [vmem:[%s3] sm:$0xf]
        %v818 = vld [vmem:[%s3 + $0x4] sm:$0xf]
        %v819 = vld [vmem:[%s3 + $0x8] sm:$0xf]
        %v820 = vld [vmem:[%s3 + $0xc] sm:$0xf]
        %v821 = vld [vmem:[%s3 + $0x10] sm:$0xf]
        %v822 = vld [vmem:[%s3 + $0x14] sm:$0xf]
        %v823 = vld [vmem:[%s3 + $0x18] sm:$0xf]
        %v824 = vld [vmem:[%s3 + $0x1c] sm:$0xf]
        %v825 = vld [vmem:[%s3 + $0x20] sm:$0xf]
        %v826 = vld [vmem:[%s3 + $0x24] sm:$0xf]
        %v827 = vld [vmem:[%s3 + $0x28] sm:$0xf]
        %v828 = vld [vmem:[%s3 + $0x2c] sm:$0xf]
        %v829 = vld [vmem:[%s3 + $0x30] sm:$0xf]
        %v830 = vld [vmem:[%s3 + $0x34] sm:$0xf]
        %v831 = vld [vmem:[%s3 + $0x38] sm:$0xf]
        %v832 = vld [vmem:[%s3 + $0x3c] sm:$0xf]
        %v833 = vpack.c.bf16 %v787, %v785
        %v834 = vpack.c.bf16 %v788, %v786
        %v835 = vpack.c.bf16 %v791, %v789
        %v836 = vpack.c.bf16 %v792, %v790
        %v837 = vpack.c.bf16 %v795, %v793
        %v838 = vpack.c.bf16 %v796, %v794
        %v839 = vpack.c.bf16 %v799, %v797
        %v840 = vpack.c.bf16 %v800, %v798
        %v841 = vpack.c.bf16 %v803, %v801
        %v842 = vpack.c.bf16 %v804, %v802
        %v843 = vpack.c.bf16 %v807, %v805
        %v844 = vpack.c.bf16 %v808, %v806
        %v845 = vpack.c.bf16 %v811, %v809
        %v846 = vpack.c.bf16 %v812, %v810
        %v847 = vpack.c.bf16 %v815, %v813
        %v848 = vpack.c.bf16 %v816, %v814
        %v849 = vld [vmem:[%s4] sm:$0xff]
        %v850 = vld [vmem:[%s4 + $0x8] sm:$0xff]
        %v851 = vld [vmem:[%s4 + $0x10] sm:$0xff]
        %v852 = vld [vmem:[%s4 + $0x18] sm:$0xff]
        %v853 = vld [vmem:[%s4 + $0x20] sm:$0xff]
        %v854 = vld [vmem:[%s4 + $0x28] sm:$0xff]
        %v855 = vld [vmem:[%s4 + $0x30] sm:$0xff]
        %v856 = vld [vmem:[%s4 + $0x38] sm:$0xff]
        %v857 = vld [vmem:[%s4 + $0x40] sm:$0xff]
        %v858 = vld [vmem:[%s4 + $0x48] sm:$0xff]
        %v859 = vld [vmem:[%s4 + $0x50] sm:$0xff]
        %v860 = vld [vmem:[%s4 + $0x58] sm:$0xff]
        %v861 = vld [vmem:[%s4 + $0x60] sm:$0xff]
        %v862 = vld [vmem:[%s4 + $0x68] sm:$0xff]
        %v863 = vld [vmem:[%s4 + $0x70] sm:$0xff]
        %v864 = vld [vmem:[%s4 + $0x78] sm:$0xff]
        %866 = vset.pattern.permute.xlu0 0
        %867 = vperm.xlu0 %866, %v849
        %v868 = vpop.permute.xlu0 %867
        %871 = vset.pattern.permute.xlu0 0
        %872 = vperm.xlu0 %871, %v850
        %v873 = vpop.permute.xlu0 %872
        %876 = vset.pattern.permute.xlu0 0
        %877 = vperm.xlu0 %876, %v851
        %v878 = vpop.permute.xlu0 %877
        %881 = vset.pattern.permute.xlu0 0
        %882 = vperm.xlu0 %881, %v852
        %v883 = vpop.permute.xlu0 %882
        %886 = vset.pattern.permute.xlu0 0
        %887 = vperm.xlu0 %886, %v853
        %v888 = vpop.permute.xlu0 %887
        %891 = vset.pattern.permute.xlu0 0
        %892 = vperm.xlu0 %891, %v854
        %v893 = vpop.permute.xlu0 %892
        %896 = vset.pattern.permute.xlu0 0
        %897 = vperm.xlu0 %896, %v855
        %v898 = vpop.permute.xlu0 %897
        %901 = vset.pattern.permute.xlu0 0
        %902 = vperm.xlu0 %901, %v856
        %v903 = vpop.permute.xlu0 %902
        %906 = vset.pattern.permute.xlu0 0
        %907 = vperm.xlu0 %906, %v857
        %v908 = vpop.permute.xlu0 %907
        %911 = vset.pattern.permute.xlu0 0
        %912 = vperm.xlu0 %911, %v858
        %v913 = vpop.permute.xlu0 %912
        %916 = vset.pattern.permute.xlu0 0
        %917 = vperm.xlu0 %916, %v859
        %v918 = vpop.permute.xlu0 %917
        %921 = vset.pattern.permute.xlu0 0
        %922 = vperm.xlu0 %921, %v860
        %v923 = vpop.permute.xlu0 %922
        %926 = vset.pattern.permute.xlu0 0
        %927 = vperm.xlu0 %926, %v861
        %v928 = vpop.permute.xlu0 %927
        %931 = vset.pattern.permute.xlu0 0
        %932 = vperm.xlu0 %931, %v862
        %v933 = vpop.permute.xlu0 %932
        %936 = vset.pattern.permute.xlu0 0
        %937 = vperm.xlu0 %936, %v863
        %v938 = vpop.permute.xlu0 %937
        %941 = vset.pattern.permute.xlu0 0
        %942 = vperm.xlu0 %941, %v864
        %v943 = vpop.permute.xlu0 %942
        %v961 = vunpack.c.l.b16 %v817
        %v962 = vunpack.c.l.b16 %v818
        %v963 = vunpack.c.l.b16 %v819
        %v964 = vunpack.c.l.b16 %v820
        %v965 = vunpack.c.l.b16 %v821
        %v966 = vunpack.c.l.b16 %v822
        %v967 = vunpack.c.l.b16 %v823
        %v968 = vunpack.c.l.b16 %v824
        %v969 = vunpack.c.l.b16 %v825
        %v970 = vunpack.c.l.b16 %v826
        %v971 = vunpack.c.l.b16 %v827
        %v972 = vunpack.c.l.b16 %v828
        %v973 = vunpack.c.l.b16 %v829
        %v974 = vunpack.c.l.b16 %v830
        %v975 = vunpack.c.l.b16 %v831
        %v976 = vunpack.c.l.b16 %v832
        %v977 = vpack.c.b16 %v962, %v961
        %v978 = vpack.c.b16 %v964, %v963
        %v979 = vpack.c.b16 %v966, %v965
        %v980 = vpack.c.b16 %v968, %v967
        %v981 = vpack.c.b16 %v970, %v969
        %v982 = vpack.c.b16 %v972, %v971
        %v983 = vpack.c.b16 %v974, %v973
        %v984 = vpack.c.b16 %v976, %v975
        %993 = vmatprep.subr.bf16.mxu0 %v834
        %994 = vmatpush1.bf16.msra.mxu0 %v833
        %995 = vmatprep.subr.bf16.mxu0 %v836
        %996 = vmatpush1.bf16.msra.mxu0 %v835
        %997 = vmatprep.subr.bf16.mxu0 %v838
        %998 = vmatpush1.bf16.msra.mxu0 %v837
        %999 = vmatprep.subr.bf16.mxu0 %v840
        %1000 = vmatpush1.bf16.msra.mxu0 %v839
        %1001 = vmatprep.subr.bf16.mxu0 %v842
        %1002 = vmatpush1.bf16.msra.mxu0 %v841
        %1003 = vmatprep.subr.bf16.mxu0 %v844
        %1004 = vmatpush1.bf16.msra.mxu0 %v843
        %1005 = vmatprep.subr.bf16.mxu0 %v846
        %1006 = vmatpush1.bf16.msra.mxu0 %v845
        %1007 = vmatprep.subr.bf16.mxu0 %v848
        %1008 = vmatpush1.bf16.msra.mxu0 %v847
        %1009 = vmatprep.subr.bf16.mxu0 0
        %1010 = vmatpush1.bf16.msra.mxu0 0
        %1011 = vmatprep.subr.bf16.mxu0 0
        %1012 = vmatpush1.bf16.msra.mxu0 0
        %1013 = vmatprep.subr.bf16.mxu0 0
        %1014 = vmatpush1.bf16.msra.mxu0 0
        %1015 = vmatprep.subr.bf16.mxu0 0
        %1016 = vmatpush1.bf16.msra.mxu0 0
        %1017 = vmatprep.subr.bf16.mxu0 0
        %1018 = vmatpush1.bf16.msra.mxu0 0
        %1019 = vmatprep.subr.bf16.mxu0 0
        %1020 = vmatpush1.bf16.msra.mxu0 0
        %1021 = vmatprep.subr.bf16.mxu0 0
        %1022 = vmatpush1.bf16.msra.mxu0 0
        %1023 = vmatprep.subr.bf16.mxu0 0
        %1024 = vmatpush1.bf16.msra.mxu0 0
        %1025 = vmatprep.mubr.bf16.mxu0 0
        %1026 = vmatmul.mubr.bf16.gmra.mrb[0].mxu0 %v977
        %v1027 = vpop.f32.mrb[0].mxu0
        %v1028 = vadd.f32 %v868, %v1027
        %v1029 = vpop.f32.mrb[0].mxu0
        %v1030 = vadd.f32 %v868, %v1029
        %v1031 = vpop.f32.mrb[0].mxu0
        %v1032 = vadd.f32 %v873, %v1031
        %v1033 = vpop.f32.mrb[0].mxu0
        %v1034 = vadd.f32 %v873, %v1033
        %1035 = vmatprep.mubr.bf16.mxu0 0
        %1036 = vmatmul.mubr.bf16.gmra.mrb[0].mxu0 %v978
        %v1037 = vpop.f32.mrb[0].mxu0
        %v1038 = vadd.f32 %v878, %v1037
        %v1039 = vpop.f32.mrb[0].mxu0
        %v1040 = vadd.f32 %v878, %v1039
        %v1041 = vpop.f32.mrb[0].mxu0
        %v1042 = vadd.f32 %v883, %v1041
        %v1043 = vpop.f32.mrb[0].mxu0
        %v1044 = vadd.f32 %v883, %v1043
        %1045 = vmatprep.mubr.bf16.mxu0 0
        %1046 = vmatmul.mubr.bf16.gmra.mrb[0].mxu0 %v979
        %v1047 = vpop.f32.mrb[0].mxu0
        %v1048 = vadd.f32 %v888, %v1047
        %v1049 = vpop.f32.mrb[0].mxu0
        %v1050 = vadd.f32 %v888, %v1049
        %v1051 = vpop.f32.mrb[0].mxu0
        %v1052 = vadd.f32 %v893, %v1051
        %v1053 = vpop.f32.mrb[0].mxu0
        %v1054 = vadd.f32 %v893, %v1053
        %1055 = vmatprep.mubr.bf16.mxu0 0
        %1056 = vmatmul.mubr.bf16.gmra.mrb[0].mxu0 %v980
        %v1057 = vpop.f32.mrb[0].mxu0
        %v1058 = vadd.f32 %v898, %v1057
        %v1059 = vpop.f32.mrb[0].mxu0
        %v1060 = vadd.f32 %v898, %v1059
        %v1061 = vpop.f32.mrb[0].mxu0
        %v1062 = vadd.f32 %v903, %v1061
        %v1063 = vpop.f32.mrb[0].mxu0
        %v1064 = vadd.f32 %v903, %v1063
        %1065 = vmatprep.mubr.bf16.mxu0 0
        %1066 = vmatmul.mubr.bf16.gmra.mrb[0].mxu0 %v981
        %v1067 = vpop.f32.mrb[0].mxu0
        %v1068 = vadd.f32 %v908, %v1067
        %v1069 = vpop.f32.mrb[0].mxu0
        %v1070 = vadd.f32 %v908, %v1069
        %v1071 = vpop.f32.mrb[0].mxu0
        %v1072 = vadd.f32 %v913, %v1071
        %v1073 = vpop.f32.mrb[0].mxu0
        %v1074 = vadd.f32 %v913, %v1073
        %1075 = vmatprep.mubr.bf16.mxu0 0
        %1076 = vmatmul.mubr.bf16.gmra.mrb[0].mxu0 %v982
        %v1077 = vpop.f32.mrb[0].mxu0
        %v1078 = vadd.f32 %v918, %v1077
        %v1079 = vpop.f32.mrb[0].mxu0
        %v1080 = vadd.f32 %v918, %v1079
        %v1081 = vpop.f32.mrb[0].mxu0
        %v1082 = vadd.f32 %v923, %v1081
        %v1083 = vpop.f32.mrb[0].mxu0
        %v1084 = vadd.f32 %v923, %v1083
        %1085 = vmatprep.mubr.bf16.mxu0 0
        %1086 = vmatmul.mubr.bf16.gmra.mrb[0].mxu0 %v983
        %v1087 = vpop.f32.mrb[0].mxu0
        %v1088 = vadd.f32 %v928, %v1087
        %v1089 = vpop.f32.mrb[0].mxu0
        %v1090 = vadd.f32 %v928, %v1089
        %v1091 = vpop.f32.mrb[0].mxu0
        %v1092 = vadd.f32 %v933, %v1091
        %v1093 = vpop.f32.mrb[0].mxu0
        %v1094 = vadd.f32 %v933, %v1093
        %1095 = vmatprep.mubr.bf16.mxu0 0
        %1096 = vmatmul.mubr.bf16.gmra.mrb[0].mxu0 %v984
        %v1097 = vpop.f32.mrb[0].mxu0
        %v1098 = vadd.f32 %v938, %v1097
        %v1099 = vpop.f32.mrb[0].mxu0
        %v1100 = vadd.f32 %v938, %v1099
        %v1101 = vpop.f32.mrb[0].mxu0
        %v1102 = vadd.f32 %v943, %v1101
        %v1103 = vpop.f32.mrb[0].mxu0
        %v1104 = vadd.f32 %v943, %v1103
        %1105 = vdwg.mxu0
        %vm1106 = vcmp.gt.f32.partialorder %v1028, 0.0
        %vm1107 = vcmp.gt.f32.partialorder %v1030, 0.0
        %vm1108 = vcmp.gt.f32.partialorder %v1032, 0.0
        %vm1109 = vcmp.gt.f32.partialorder %v1034, 0.0
        %vm1110 = vcmp.gt.f32.partialorder %v1038, 0.0
        %vm1111 = vcmp.gt.f32.partialorder %v1040, 0.0
        %vm1112 = vcmp.gt.f32.partialorder %v1042, 0.0
        %vm1113 = vcmp.gt.f32.partialorder %v1044, 0.0
        %vm1114 = vcmp.gt.f32.partialorder %v1048, 0.0
        %vm1115 = vcmp.gt.f32.partialorder %v1050, 0.0
        %vm1116 = vcmp.gt.f32.partialorder %v1052, 0.0
        %vm1117 = vcmp.gt.f32.partialorder %v1054, 0.0
        %vm1118 = vcmp.gt.f32.partialorder %v1058, 0.0
        %vm1119 = vcmp.gt.f32.partialorder %v1060, 0.0
        %vm1120 = vcmp.gt.f32.partialorder %v1062, 0.0
        %vm1121 = vcmp.gt.f32.partialorder %v1064, 0.0
        %vm1122 = vcmp.gt.f32.partialorder %v1068, 0.0
        %vm1123 = vcmp.gt.f32.partialorder %v1070, 0.0
        %vm1124 = vcmp.gt.f32.partialorder %v1072, 0.0
        %vm1125 = vcmp.gt.f32.partialorder %v1074, 0.0
        %vm1126 = vcmp.gt.f32.partialorder %v1078, 0.0
        %vm1127 = vcmp.gt.f32.partialorder %v1080, 0.0
        %vm1128 = vcmp.gt.f32.partialorder %v1082, 0.0
        %vm1129 = vcmp.gt.f32.partialorder %v1084, 0.0
        %vm1130 = vcmp.gt.f32.partialorder %v1088, 0.0
        %vm1131 = vcmp.gt.f32.partialorder %v1090, 0.0
        %vm1132 = vcmp.gt.f32.partialorder %v1092, 0.0
        %vm1133 = vcmp.gt.f32.partialorder %v1094, 0.0
        %vm1134 = vcmp.gt.f32.partialorder %v1098, 0.0
        %vm1135 = vcmp.gt.f32.partialorder %v1100, 0.0
        %vm1136 = vcmp.gt.f32.partialorder %v1102, 0.0
        %vm1137 = vcmp.gt.f32.partialorder %v1104, 0.0
        %v1138 = vmul.f32 %v1028, 0.2
        %v1139 = vmul.f32 %v1030, 0.2
        %v1140 = vmul.f32 %v1032, 0.2
        %v1141 = vmul.f32 %v1034, 0.2
        %v1142 = vmul.f32 %v1038, 0.2
        %v1143 = vmul.f32 %v1040, 0.2
        %v1144 = vmul.f32 %v1042, 0.2
        %v1145 = vmul.f32 %v1044, 0.2
        %v1146 = vmul.f32 %v1048, 0.2
        %v1147 = vmul.f32 %v1050, 0.2
        %v1148 = vmul.f32 %v1052, 0.2
        %v1149 = vmul.f32 %v1054, 0.2
        %v1150 = vmul.f32 %v1058, 0.2
        %v1151 = vmul.f32 %v1060, 0.2
        %v1152 = vmul.f32 %v1062, 0.2
        %v1153 = vmul.f32 %v1064, 0.2
        %v1154 = vmul.f32 %v1068, 0.2
        %v1155 = vmul.f32 %v1070, 0.2
        %v1156 = vmul.f32 %v1072, 0.2
        %v1157 = vmul.f32 %v1074, 0.2
        %v1158 = vmul.f32 %v1078, 0.2
        %v1159 = vmul.f32 %v1080, 0.2
        %v1160 = vmul.f32 %v1082, 0.2
        %v1161 = vmul.f32 %v1084, 0.2
        %v1162 = vmul.f32 %v1088, 0.2
        %v1163 = vmul.f32 %v1090, 0.2
        %v1164 = vmul.f32 %v1092, 0.2
        %v1165 = vmul.f32 %v1094, 0.2
        %v1166 = vmul.f32 %v1098, 0.2
        %v1167 = vmul.f32 %v1100, 0.2
        %v1168 = vmul.f32 %v1102, 0.2
        %v1169 = vmul.f32 %v1104, 0.2
        %v1170 = vsel %vm1106, %v1028, %v1138
        %v1171 = vsel %vm1107, %v1030, %v1139
        %v1172 = vsel %vm1108, %v1032, %v1140
        %v1173 = vsel %vm1109, %v1034, %v1141
        %v1174 = vsel %vm1110, %v1038, %v1142
        %v1175 = vsel %vm1111, %v1040, %v1143
        %v1176 = vsel %vm1112, %v1042, %v1144
        %v1177 = vsel %vm1113, %v1044, %v1145
        %v1178 = vsel %vm1114, %v1048, %v1146
        %v1179 = vsel %vm1115, %v1050, %v1147
        %v1180 = vsel %vm1116, %v1052, %v1148
        %v1181 = vsel %vm1117, %v1054, %v1149
        %v1182 = vsel %vm1118, %v1058, %v1150
        %v1183 = vsel %vm1119, %v1060, %v1151
        %v1184 = vsel %vm1120, %v1062, %v1152
        %v1185 = vsel %vm1121, %v1064, %v1153
        %v1186 = vsel %vm1122, %v1068, %v1154
        %v1187 = vsel %vm1123, %v1070, %v1155
        %v1188 = vsel %vm1124, %v1072, %v1156
        %v1189 = vsel %vm1125, %v1074, %v1157
        %v1190 = vsel %vm1126, %v1078, %v1158
        %v1191 = vsel %vm1127, %v1080, %v1159
        %v1192 = vsel %vm1128, %v1082, %v1160
        %v1193 = vsel %vm1129, %v1084, %v1161
        %v1194 = vsel %vm1130, %v1088, %v1162
        %v1195 = vsel %vm1131, %v1090, %v1163
        %v1196 = vsel %vm1132, %v1092, %v1164
        %v1197 = vsel %vm1133, %v1094, %v1165
        %v1198 = vsel %vm1134, %v1098, %v1166
        %v1199 = vsel %vm1135, %v1100, %v1167
        %v1200 = vsel %vm1136, %v1102, %v1168
        %v1201 = vsel %vm1137, %v1104, %v1169
        %v1202 = vld [vmem:[%s5] sm:$0x1]
        %v1203 = vpack.c.bf16 %v1172, %v1170
        %v1204 = vpack.c.bf16 %v1173, %v1171
        %v1205 = vpack.c.bf16 %v1176, %v1174
        %v1206 = vpack.c.bf16 %v1177, %v1175
        %v1207 = vpack.c.bf16 %v1180, %v1178
        %v1208 = vpack.c.bf16 %v1181, %v1179
        %v1209 = vpack.c.bf16 %v1184, %v1182
        %v1210 = vpack.c.bf16 %v1185, %v1183
        %v1211 = vpack.c.bf16 %v1188, %v1186
        %v1212 = vpack.c.bf16 %v1189, %v1187
        %v1213 = vpack.c.bf16 %v1192, %v1190
        %v1214 = vpack.c.bf16 %v1193, %v1191
        %v1215 = vpack.c.bf16 %v1196, %v1194
        %v1216 = vpack.c.bf16 %v1197, %v1195
        %v1217 = vpack.c.bf16 %v1200, %v1198
        %v1218 = vpack.c.bf16 %v1201, %v1199
        %v1219 = vld [vmem:[#allocation2] sm:$0x1]
        %1221 = vset.pattern.permute.xlu0 0
        %1222 = vperm.xlu0 %1221, %v1219
        %v1223 = vpop.permute.xlu0 %1222
        %v1225 = vlaneseq
        %v1226 = vshrl.u32 %v1225, 7
        %v1227 = vsub.s32 0, %v1226
        %v1228 = vrot.slane %v1223, %v1227
        %1229 = vmatprep.subr.bf16.mxu0 %v1204
        %1230 = vmatpush1.bf16.msra.mxu0 %v1203
        %1231 = vmatprep.subr.bf16.mxu0 %v1206
        %1232 = vmatpush1.bf16.msra.mxu0 %v1205
        %1233 = vmatprep.subr.bf16.mxu0 %v1208
        %1234 = vmatpush1.bf16.msra.mxu0 %v1207
        %1235 = vmatprep.subr.bf16.mxu0 %v1210
        %1236 = vmatpush1.bf16.msra.mxu0 %v1209
        %1237 = vmatprep.subr.bf16.mxu0 %v1212
        %1238 = vmatpush1.bf16.msra.mxu0 %v1211
        %1239 = vmatprep.subr.bf16.mxu0 %v1214
        %1240 = vmatpush1.bf16.msra.mxu0 %v1213
        %1241 = vmatprep.subr.bf16.mxu0 %v1216
        %1242 = vmatpush1.bf16.msra.mxu0 %v1215
        %1243 = vmatprep.subr.bf16.mxu0 %v1218
        %1244 = vmatpush1.bf16.msra.mxu0 %v1217
        %1245 = vmatprep.subr.bf16.mxu0 0
        %1246 = vmatpush1.bf16.msra.mxu0 0
        %1247 = vmatprep.subr.bf16.mxu0 0
        %1248 = vmatpush1.bf16.msra.mxu0 0
        %1249 = vmatprep.subr.bf16.mxu0 0
        %1250 = vmatpush1.bf16.msra.mxu0 0
        %1251 = vmatprep.subr.bf16.mxu0 0
        %1252 = vmatpush1.bf16.msra.mxu0 0
        %1253 = vmatprep.subr.bf16.mxu0 0
        %1254 = vmatpush1.bf16.msra.mxu0 0
        %1255 = vmatprep.subr.bf16.mxu0 0
        %1256 = vmatpush1.bf16.msra.mxu0 0
        %1257 = vmatprep.subr.bf16.mxu0 0
        %1258 = vmatpush1.bf16.msra.mxu0 0
        %1259 = vmatprep.subr.bf16.mxu0 0
        %1260 = vmatpush1.bf16.msra.mxu0 0
        %1261 = vmatprep.mubr.bf16.mxu0 0
        %1262 = vmatmul.mubr.bf16.gmra.mrb[0].mxu0 %v1202
        %v1263 = vpop.f32.mrb[0].mxu0
        %v1264 = vadd.f32 %v1228, %v1263
        %v1265 = vpop.f32.mrb[0].mxu0
        %v1266 = vadd.f32 %v1228, %v1265
        %v1267 = vpop.f32.mrb[0].mxu0
        %v1268 = vpop.f32.mrb[0].mxu0
        %1269 = vdwg.mxu0
        %v1272 = vcombine.low %v1264, %v1266
        %v1274 = vunpack.c.l.s4 1966171168
        %v1275 = vunpack.c.0.s8 %v1274
        %v1276 = vlaneseq
        %v1277 = vshrl.u32 %v1276, 7
        %v1278 = vsub.s32 %v1275, %v1277
        %v1279 = vrot.slane %v1272, %v1278
        %v1281 = vunpack.c.l.s4 1966171168
        %v1282 = vunpack.c.0.s8 %v1281
        %v1283 = vlaneseq
        %v1284 = vshrl.u32 %v1283, 7
        %v1285 = vsub.s32 %v1282, %v1284
        %v1286 = vrot.slane %v1279, %v1285
        %v1288 = vlaneseq
        %vm1289 = vcmp.ge.s32.totalorder %v1288, 0
        %vm1290 = vcmp.lt.s32.totalorder %v1288, 256
        %vm1291 = vmand %vm1289, %vm1290
        %1292 = vst.msk [vmem:[%s316] sm:$0x3] %vm1291, %v1286
        %s1293 = sand.u32 %s202, 1
        %s1294 = scalar_lea.sflag [#allocation5], %s1293
        %s1295 = sand.u32 %s202, 1
        %s1296 = smul.addr %s1295, 2
        %s1297 = scalar_lea.vmem [#allocation6], %s1296
        // Predicated region
        $region53: #{tpu_custom_call.1} parent=47 // pred_check
          %p1298 = pneg %p212
        $region54: #{tpu_custom_call.1} parent=47 // pred_check_branch
          %1300 = sbr.rel (%p1298) target = $region56
        $region55: #{tpu_custom_call.1} parent=47 // pred_region
          %s1301 = smul.u32 2, %s31
          %s1303 = ssub.s32 32, 32
          %1304 = vsyncadd %s1294, %s1303
          %s1305 = smul.addr %s30, 2
          %s1306 = sadd.s32 %s1301, %s1305
          %s1307 = smul.addr %s1306, 16
          %s1308 = scalar_lea.hbm %s7, %s1307
          %s1310 = sshll.u32 %s1297, 4
          %s1311 = int_to_ptr.vmem [resolvable:$true] %s1310
          %1313 = dma.vmem_to_hbm [thread:$0]  %s1311, 32, %s1308, %s1294
        $region56: #{tpu_custom_call.1} parent=47 // pred_fallthru
          _
      $region48: #{tpu_custom_call.1} parent=5 // pred_fallthru
        _
      %p1314 = scmp.le.s32.totalorder 2, %s21
      // Predicated region
      $region57: #{tpu_custom_call.1} parent=5 // pred_check
        %p1315 = pneg %p1314
      $region58: #{tpu_custom_call.1} parent=5 // pred_check_branch
        %1317 = sbr.rel (%p1315) target = $region60
      $region59: #{tpu_custom_call.1} parent=5 // pred_region
        %s1318 = ssub.s32 %s21, 2
        // Predicated region
        $region61: #{tpu_custom_call.1} parent=59 // pred_check
          %p1319 = pneg %p218
        $region62: #{tpu_custom_call.1} parent=59 // pred_check_branch
          %1321 = sbr.rel (%p1319) target = $region64
        $region63: #{tpu_custom_call.1} parent=59 // pred_region
          %s1322 = sand.u32 %s203, 1
          %s1323 = scalar_lea.sflag [#allocation5], %s1322
          %s1324 = sand.u32 %s203, 1
          %s1325 = smul.addr %s1324, 2
          %s1326 = scalar_lea.vmem [#allocation6], %s1325
          %1327 = dma.done %s1323, 32
        $region64: #{tpu_custom_call.1} parent=59 // pred_fallthru
          _
      $region60: #{tpu_custom_call.1} parent=5 // pred_fallthru
        _
    $region6: #{tpu_custom_call.1} parent=1 // loop_footer
      %s25 = sadd.s32 1, %s21
    $region7: #{tpu_custom_call.1} parent=1 // loop_footer_branch
      %20 = sbr.rel target = $region3
    $region8: #{tpu_custom_call.1} parent=1 // loop_exit
      _
    %1328 = vsyncpa [#allocation4], 1
    %s1329 = scalar_lea.sflag [#allocation4], 1
    %1330 = vsyncpa %s1329, 1
    %1331 = vsyncpa [#allocation5], 1
    %s1332 = scalar_lea.sflag [#allocation5], 1
    %1333 = vsyncpa %s1332, 1

// kernel: tpu_custom_call.1
$region0: #{tpu_custom_call.1}
  #allocation0 [shape = 'u32[]', space=smem, size = 0x4, offset = 0x4, fixed_abs, tag = 'smem constant byte address 0x4 - core index']
  #allocation1 [shape = 'u32[144,128]{1,0:T(1,128)}', space=vmem, size = 0x12000, scoped, tag = 'internal scratch']
  #allocation2 [shape = 'f32[1,1]{1,0:T(1,128)S(1)}', space=vmem, size = 0x200, scoped, tag = 'scoped memory for tpu_custom_call.1']
  %s0 = inlined_call_operand.hbm [shape: f32[2,256,256], index: 0, kind: input, shape index: {}]
  %s1 = inlined_call_operand.vmem [shape: bf16[128,256], index: 1, kind: input, shape index: {}]
  %s2 = inlined_call_operand.vmem [shape: f32[128,1], index: 2, kind: input, shape index: {}]
  %s3 = inlined_call_operand.vmem [shape: bf16[128,128], index: 3, kind: input, shape index: {}]
  %s4 = inlined_call_operand.vmem [shape: f32[128,1], index: 4, kind: input, shape index: {}]
  %s5 = inlined_call_operand.vmem [shape: bf16[1,128], index: 5, kind: input, shape index: {}]
  %s6 = inlined_call_operand.<no memory space> [shape: f32[1,1], index: 6, kind: input, shape index: {}]
  %s7 = inlined_call_operand.hbm [shape: f32[2,1,256], index: 7, kind: output, shape index: {}]
  %s8 = sld [smem:[#allocation0]]
  $region65: #{tpu_custom_call.1} parent=0
    _
  %s10 = ssub.s32 1, %s8
  %s11 = scalar_select 0, %s10, %s8
  %v12 = vstv %s6
  %13 = vst [vmem:[#allocation2] sm:$0x1] %v12
  $region1: #{tpu_custom_call.1} parent=0
    #allocation3 [shape = 'u8[524288]{0}', space=vmem, size = 0x80000, scoped, tag = 'input window, operand 0']
    #allocation4 [shape = 's32[2]{0}', space=sflag, size = 0x8, scoped, tag = 'scoped memory for tpu_custom_call.1']
    #allocation5 [shape = 's32[2]{0}', space=sflag, size = 0x8, scoped, tag = 'scoped memory for tpu_custom_call.1']
    #allocation6 [shape = 'u8[2048]{0}', space=vmem, size = 0x800, scoped, tag = 'output window, operand 0']
    %14 = vsyncpa [#allocation4], 0
    %s15 = scalar_lea.sflag [#allocation4], 1
    %16 = vsyncpa %s15, 0
    %17 = vsyncpa [#allocation5], 0
    %s18 = scalar_lea.sflag [#allocation5], 1
    %19 = vsyncpa %s18, 0
    loop: start=0, step=1, limit=4
    $region2: #{tpu_custom_call.1} parent=1 // loop_pre_header
      _
    $region3: #{tpu_custom_call.1} parent=1 // loop_header
      %s21 = sphi 0, %s25
      %p22 = scmp.ge.s32.totalorder %s21, 4
      %s28 = sphi 0, %s40
      %s29 = sphi 0, %s36
      %s30 = sphi 0, %s28
      %s31 = sphi 0, %s29
      %s32 = sphi 0, %s30
      %s33 = sphi 0, %s31
      %s45 = sphi 0, %s47
      %s48 = sphi 0, %s45
      %s49 = sphi 0, %s48
      %s65 = sphi 0, %s49
      %s69 = sphi 0, %s69
      %s71 = sphi 0, %s69
      %s72 = sphi 0, %s71
      %s86 = sphi 0, %s72
      %s90 = sphi 0, %s90
      %s92 = sphi 0, %s90
      %s93 = sphi 0, %s92
      %s107 = sphi 0, %s93
      %s111 = sphi 0, %s111
      %s113 = sphi 0, %s111
      %s114 = sphi 0, %s113
      %s128 = sphi 0, %s114
      %s132 = sphi 0, %s132
      %s134 = sphi 0, %s132
      %s135 = sphi 0, %s134
      %s149 = sphi 0, %s135
      %s153 = sphi 0, %s153
      %s155 = sphi 0, %s153
      %s156 = sphi 0, %s155
      %s170 = sphi 0, %s156
      %s174 = sphi 0, %s174
      %s176 = sphi 0, %s174
      %s177 = sphi 0, %s176
      %s191 = sphi 0, %s177
      %s199 = sphi 0, %s201
      %s202 = sphi 0, %s199
      %s203 = sphi 0, %s202
      %s219 = sphi 0, %s203
    $region4: #{tpu_custom_call.1} parent=1 // loop_header_branch
      %24 = sbr.rel (%p22) target = $region8
    $region5: #{tpu_custom_call.1} parent=1 // loop_body
      %s26 = ssub.s32 %s21, 1
      %s27 = ssub.s32 %s21, 2
      %s34 = sadd.s32 1, %s29
      %p35 = scmp.ge.s32.totalorder %s34, 1
      %s36 = scalar_select %p35, 0, %s34
      %s37 = sadd.s32 1, %s28
      %s38 = scalar_select %p35, %s37, %s28
      %p39 = scmp.ge.s32.totalorder %s38, 2
      %s40 = scalar_select %p39, 0, %s38
      %s41 = ssub.s32 %s28, %s40
      %s42 = ssub.s32 %s29, %s36
      %s43 = sor.u32 %s41, %s42
      %p44 = scmp.eq.s32.totalorder %s43, 0
      %s46 = sadd.s32 %s45, 1
      %s47 = scalar_select %p44, %s45, %s46
      %p50 = pneg %p44
      %p51 = scmp.eq.s32.totalorder %s21, 1
      %p52 = por %p50, %p51
      %p53 = scmp.ne.s32.totalorder %s45, %s48
      %p54 = scmp.eq.s32.totalorder %s21, 0
      %p55 = por %p53, %p54
      %p56 = scmp.ne.s32.totalorder %s45, %s48
      %p57 = scmp.eq.s32.totalorder %s26, 1
      %p58 = por %p56, %p57
      %p59 = scmp.ne.s32.totalorder %s48, %s49
      %p60 = scmp.eq.s32.totalorder %s26, 0
      %p61 = por %p59, %p60
      %p62 = scmp.ne.s32.totalorder %s48, %s49
      %p63 = scmp.eq.s32.totalorder %s27, 1
      %p64 = por %p62, %p63
      %p66 = scmp.ne.s32.totalorder %s49, %s65
      %p67 = scmp.eq.s32.totalorder %s27, 0
      %p68 = por %p66, %p67
      %s70 = sadd.s32 %s69, 1
      %p73 = scmp.eq.s32.totalorder %s21, 1
      %p74 = scmp.ne.s32.totalorder %s69, %s71
      %p75 = scmp.eq.s32.totalorder %s21, 0
      %p76 = por %p74, %p75
      %p77 = scmp.ne.s32.totalorder %s69, %s71
      %p78 = scmp.eq.s32.totalorder %s26, 1
      %p79 = por %p77, %p78
      %p80 = scmp.ne.s32.totalorder %s71, %s72
      %p81 = scmp.eq.s32.totalorder %s26, 0
      %p82 = por %p80, %p81
      %p83 = scmp.ne.s32.totalorder %s71, %s72
      %p84 = scmp.eq.s32.totalorder %s27, 1
      %p85 = por %p83, %p84
      %p87 = scmp.ne.s32.totalorder %s72, %s86
      %p88 = scmp.eq.s32.totalorder %s27, 0
      %p89 = por %p87, %p88
      %s91 = sadd.s32 %s90, 1
      %p94 = scmp.eq.s32.totalorder %s21, 1
      %p95 = scmp.ne.s32.totalorder %s90, %s92
      %p96 = scmp.eq.s32.totalorder %s21, 0
      %p97 = por %p95, %p96
      %p98 = scmp.ne.s32.totalorder %s90, %s92
      %p99 = scmp.eq.s32.totalorder %s26, 1
      %p100 = por %p98, %p99
      %p101 = scmp.ne.s32.totalorder %s92, %s93
      %p102 = scmp.eq.s32.totalorder %s26, 0
      %p103 = por %p101, %p102
      %p104 = scmp.ne.s32.totalorder %s92, %s93
      %p105 = scmp.eq.s32.totalorder %s27, 1
      %p106 = por %p104, %p105
      %p108 = scmp.ne.s32.totalorder %s93, %s107
      %p109 = scmp.eq.s32.totalorder %s27, 0
      %p110 = por %p108, %p109
      %s112 = sadd.s32 %s111, 1
      %p115 = scmp.eq.s32.totalorder %s21, 1
      %p116 = scmp.ne.s32.totalorder %s111, %s113
      %p117 = scmp.eq.s32.totalorder %s21, 0
      %p118 = por %p116, %p117
      %p119 = scmp.ne.s32.totalorder %s111, %s113
      %p120 = scmp.eq.s32.totalorder %s26, 1
      %p121 = por %p119, %p120
      %p122 = scmp.ne.s32.totalorder %s113, %s114
      %p123 = scmp.eq.s32.totalorder %s26, 0
      %p124 = por %p122, %p123
      %p125 = scmp.ne.s32.totalorder %s113, %s114
      %p126 = scmp.eq.s32.totalorder %s27, 1
      %p127 = por %p125, %p126
      %p129 = scmp.ne.s32.totalorder %s114, %s128
      %p130 = scmp.eq.s32.totalorder %s27, 0
      %p131 = por %p129, %p130
      %s133 = sadd.s32 %s132, 1
      %p136 = scmp.eq.s32.totalorder %s21, 1
      %p137 = scmp.ne.s32.totalorder %s132, %s134
      %p138 = scmp.eq.s32.totalorder %s21, 0
      %p139 = por %p137, %p138
      %p140 = scmp.ne.s32.totalorder %s132, %s134
      %p141 = scmp.eq.s32.totalorder %s26, 1
      %p142 = por %p140, %p141
      %p143 = scmp.ne.s32.totalorder %s134, %s135
      %p144 = scmp.eq.s32.totalorder %s26, 0
      %p145 = por %p143, %p144
      %p146 = scmp.ne.s32.totalorder %s134, %s135
      %p147 = scmp.eq.s32.totalorder %s27, 1
      %p148 = por %p146, %p147
      %p150 = scmp.ne.s32.totalorder %s135, %s149
      %p151 = scmp.eq.s32.totalorder %s27, 0
      %p152 = por %p150, %p151
      %s154 = sadd.s32 %s153, 1
      %p157 = scmp.eq.s32.totalorder %s21, 1
      %p158 = scmp.ne.s32.totalorder %s153, %s155
      %p159 = scmp.eq.s32.totalorder %s21, 0
      %p160 = por %p158, %p159
      %p161 = scmp.ne.s32.totalorder %s153, %s155
      %p162 = scmp.eq.s32.totalorder %s26, 1
      %p163 = por %p161, %p162
      %p164 = scmp.ne.s32.totalorder %s155, %s156
      %p165 = scmp.eq.s32.totalorder %s26, 0
      %p166 = por %p164, %p165
      %p167 = scmp.ne.s32.totalorder %s155, %s156
      %p168 = scmp.eq.s32.totalorder %s27, 1
      %p169 = por %p167, %p168
      %p171 = scmp.ne.s32.totalorder %s156, %s170
      %p172 = scmp.eq.s32.totalorder %s27, 0
      %p173 = por %p171, %p172
      %s175 = sadd.s32 %s174, 1
      %p178 = scmp.eq.s32.totalorder %s21, 1
      %p179 = scmp.ne.s32.totalorder %s174, %s176
      %p180 = scmp.eq.s32.totalorder %s21, 0
      %p181 = por %p179, %p180
      %p182 = scmp.ne.s32.totalorder %s174, %s176
      %p183 = scmp.eq.s32.totalorder %s26, 1
      %p184 = por %p182, %p183
      %p185 = scmp.ne.s32.totalorder %s176, %s177
      %p186 = scmp.eq.s32.totalorder %s26, 0
      %p187 = por %p185, %p186
      %p188 = scmp.ne.s32.totalorder %s176, %s177
      %p189 = scmp.eq.s32.totalorder %s27, 1
      %p190 = por %p188, %p189
      %p192 = scmp.ne.s32.totalorder %s177, %s191
      %p193 = scmp.eq.s32.totalorder %s27, 0
      %p194 = por %p192, %p193
      %s195 = ssub.s32 %s28, %s40
      %s196 = ssub.s32 %s29, %s36
      %s197 = sor.u32 %s195, %s196
      %p198 = scmp.eq.s32.totalorder %s197, 0
      %s200 = sadd.s32 %s199, 1
      %s201 = scalar_select %p198, %s199, %s200
      %p204 = pneg %p198
      %p205 = scmp.eq.s32.totalorder %s21, 1
      %p206 = por %p204, %p205
      %p207 = scmp.ne.s32.totalorder %s199, %s202
      %p208 = scmp.eq.s32.totalorder %s21, 0
      %p209 = por %p207, %p208
      %p210 = scmp.ne.s32.totalorder %s199, %s202
      %p211 = scmp.eq.s32.totalorder %s26, 1
      %p212 = por %p210, %p211
      %p213 = scmp.ne.s32.totalorder %s202, %s203
      %p214 = scmp.eq.s32.totalorder %s26, 0
      %p215 = por %p213, %p214
      %p216 = scmp.ne.s32.totalorder %s202, %s203
      %p217 = scmp.eq.s32.totalorder %s27, 1
      %p218 = por %p216, %p217
      %p220 = scmp.ne.s32.totalorder %s203, %s219
      %p221 = scmp.eq.s32.totalorder %s27, 0
      %p222 = por %p220, %p221
      %p223 = scmp.le.s32.totalorder 1, %s21
      %p224 = scmp.lt.s32.totalorder %s21, 3
      %p225 = pnand %p223, %p224
      %p226 = pneg %p225
      // Predicated region
      $region9: #{tpu_custom_call.1} parent=5 // pred_check
        _
      $region10: #{tpu_custom_call.1} parent=5 // pred_check_branch
        %228 = sbr.rel (%p225) target = $region12
      $region11: #{tpu_custom_call.1} parent=5 // pred_region
        %s229 = ssub.s32 %s21, 1
        // Predicated region
        $region13: #{tpu_custom_call.1} parent=11 // pred_check
          %p230 = pneg %p82
        $region14: #{tpu_custom_call.1} parent=11 // pred_check_branch
          %232 = sbr.rel (%p230) target = $region16
        $region15: #{tpu_custom_call.1} parent=11 // pred_region
          _
        $region16: #{tpu_custom_call.1} parent=11 // pred_fallthru
          _
        // Predicated region
        $region17: #{tpu_custom_call.1} parent=11 // pred_check
          %p233 = pneg %p103
        $region18: #{tpu_custom_call.1} parent=11 // pred_check_branch
          %235 = sbr.rel (%p233) target = $region20
        $region19: #{tpu_custom_call.1} parent=11 // pred_region
          _
        $region20: #{tpu_custom_call.1} parent=11 // pred_fallthru
          _
        // Predicated region
        $region21: #{tpu_custom_call.1} parent=11 // pred_check
          %p236 = pneg %p124
        $region22: #{tpu_custom_call.1} parent=11 // pred_check_branch
          %238 = sbr.rel (%p236) target = $region24
        $region23: #{tpu_custom_call.1} parent=11 // pred_region
          _
        $region24: #{tpu_custom_call.1} parent=11 // pred_fallthru
          _
        // Predicated region
        $region25: #{tpu_custom_call.1} parent=11 // pred_check
          %p239 = pneg %p145
        $region26: #{tpu_custom_call.1} parent=11 // pred_check_branch
          %241 = sbr.rel (%p239) target = $region28
        $region27: #{tpu_custom_call.1} parent=11 // pred_region
          _
        $region28: #{tpu_custom_call.1} parent=11 // pred_fallthru
          _
        // Predicated region
        $region29: #{tpu_custom_call.1} parent=11 // pred_check
          %p242 = pneg %p166
        $region30: #{tpu_custom_call.1} parent=11 // pred_check_branch
          %244 = sbr.rel (%p242) target = $region32
        $region31: #{tpu_custom_call.1} parent=11 // pred_region
          _
        $region32: #{tpu_custom_call.1} parent=11 // pred_fallthru
          _
        // Predicated region
        $region33: #{tpu_custom_call.1} parent=11 // pred_check
          %p245 = pneg %p187
        $region34: #{tpu_custom_call.1} parent=11 // pred_check_branch
          %247 = sbr.rel (%p245) target = $region36
        $region35: #{tpu_custom_call.1} parent=11 // pred_region
          _
        $region36: #{tpu_custom_call.1} parent=11 // pred_fallthru
          _
      $region12: #{tpu_custom_call.1} parent=5 // pred_fallthru
        _
      %p248 = scmp.lt.s32.totalorder %s21, 2
      // Predicated region
      $region37: #{tpu_custom_call.1} parent=5 // pred_check
        %p249 = pneg %p248
      $region38: #{tpu_custom_call.1} parent=5 // pred_check_branch
        %251 = sbr.rel (%p249) target = $region40
      $region39: #{tpu_custom_call.1} parent=5 // pred_region
        // Predicated region
        $region41: #{tpu_custom_call.1} parent=39 // pred_check
          %p252 = pneg %p55
        $region42: #{tpu_custom_call.1} parent=39 // pred_check_branch
          %254 = sbr.rel (%p252) target = $region44
        $region43: #{tpu_custom_call.1} parent=39 // pred_region
          %s255 = sand.u32 %s45, 1
          %s256 = scalar_lea.sflag [#allocation4], %s255
          %s257 = sand.u32 %s45, 1
          %s258 = smul.addr %s257, 512
          %s259 = scalar_lea.vmem [#allocation3], %s258
          %s260 = smul.u32 2, %s29
          %s262 = ssub.s32 8192, 8192
          %263 = vsyncadd %s256, %s262
          %s264 = smul.addr %s28, 64
          %s265 = sadd.s32 %s260, %s264
          %s266 = smul.addr %s265, 128
          %s267 = scalar_lea.hbm %s0, %s266
          %s268 = sshll.u32 %s259, 4
          %s269 = int_to_ptr.vmem [resolvable:$true] %s268
          %274 = dma.hbm_to_vmem [thread:$0]  %s267, 8192, %s269, %s256, 256, 256, 16
        $region44: #{tpu_custom_call.1} parent=39 // pred_fallthru
          _
      $region40: #{tpu_custom_call.1} parent=5 // pred_fallthru
        _
      %p275 = scmp.le.s32.totalorder 1, %s21
      %p276 = scmp.lt.s32.totalorder %s21, 3
      %p277 = pnand %p275, %p276
      %p278 = pneg %p277
      // Predicated region
      $region45: #{tpu_custom_call.1} parent=5 // pred_check
        _
      $region46: #{tpu_custom_call.1} parent=5 // pred_check_branch
        %280 = sbr.rel (%p277) target = $region48
      $region47: #{tpu_custom_call.1} parent=5 // pred_region
        %s281 = ssub.s32 %s21, 1
        %s282 = sand.u32 %s48, 1
        %s283 = scalar_lea.sflag [#allocation4], %s282
        %s284 = sand.u32 %s48, 1
        %s285 = smul.addr %s284, 512
        %s286 = scalar_lea.vmem [#allocation3], %s285
        // Predicated region
        $region49: #{tpu_custom_call.1} parent=47 // pred_check
          %p287 = pneg %p61
        $region50: #{tpu_custom_call.1} parent=47 // pred_check_branch
          %289 = sbr.rel (%p287) target = $region52
        $region51: #{tpu_custom_call.1} parent=47 // pred_region
          %290 = dma.done %s283, 8192
        $region52: #{tpu_custom_call.1} parent=47 // pred_fallthru
          _
        %s291 = sand.u32 %s48, 1
        %s292 = scalar_lea.sflag [#allocation4], %s291
        %s293 = sand.u32 %s48, 1
        %s294 = smul.addr %s293, 512
        %s295 = scalar_lea.vmem [#allocation3], %s294
        %p296 = pneg %p61
        %p297 = pneg %p58
        %p298 = pneg %p82
        %p299 = pneg %p79
        %p300 = pneg %p103
        %p301 = pneg %p100
        %p302 = pneg %p124
        %p303 = pneg %p121
        %p304 = pneg %p145
        %p305 = pneg %p142
        %p306 = pneg %p166
        %p307 = pneg %p163
        %p308 = pneg %p187
        %p309 = pneg %p184
        %p310 = pneg %p215
        %p311 = pneg %p212
        %s312 = sand.u32 %s202, 1
        %s313 = scalar_lea.sflag [#allocation5], %s312
        %s314 = sand.u32 %s202, 1
        %s315 = smul.addr %s314, 2
        %s316 = scalar_lea.vmem [#allocation6], %s315
        %s317 = smul.u32 2, %s31
        %s318 = smul.u32 2, %s31
        %v320 = vld [vmem:[%s286] sm:$0xff]
        %v321 = vld [vmem:[%s286 + $0x8] sm:$0xff]
        %v322 = vld [vmem:[%s286 + $0x10] sm:$0xff]
        %v323 = vld [vmem:[%s286 + $0x18] sm:$0xff]
        %v324 = vld [vmem:[%s286 + $0x20] sm:$0xff]
        %v325 = vld [vmem:[%s286 + $0x28] sm:$0xff]
        %v326 = vld [vmem:[%s286 + $0x30] sm:$0xff]
        %v327 = vld [vmem:[%s286 + $0x38] sm:$0xff]
        %v328 = vld [vmem:[%s286 + $0x40] sm:$0xff]
        %v329 = vld [vmem:[%s286 + $0x48] sm:$0xff]
        %v330 = vld [vmem:[%s286 + $0x50] sm:$0xff]
        %v331 = vld [vmem:[%s286 + $0x58] sm:$0xff]
        %v332 = vld [vmem:[%s286 + $0x60] sm:$0xff]
        %v333 = vld [vmem:[%s286 + $0x68] sm:$0xff]
        %v334 = vld [vmem:[%s286 + $0x70] sm:$0xff]
        %v335 = vld [vmem:[%s286 + $0x78] sm:$0xff]
        %v336 = vld [vmem:[%s286 + $0x80] sm:$0xff]
        %v337 = vld [vmem:[%s286 + $0x88] sm:$0xff]
        %v338 = vld [vmem:[%s286 + $0x90] sm:$0xff]
        %v339 = vld [vmem:[%s286 + $0x98] sm:$0xff]
        %v340 = vld [vmem:[%s286 + $0xa0] sm:$0xff]
        %v341 = vld [vmem:[%s286 + $0xa8] sm:$0xff]
        %v342 = vld [vmem:[%s286 + $0xb0] sm:$0xff]
        %v343 = vld [vmem:[%s286 + $0xb8] sm:$0xff]
        %v344 = vld [vmem:[%s286 + $0xc0] sm:$0xff]
        %v345 = vld [vmem:[%s286 + $0xc8] sm:$0xff]
        %v346 = vld [vmem:[%s286 + $0xd0] sm:$0xff]
        %v347 = vld [vmem:[%s286 + $0xd8] sm:$0xff]
        %v348 = vld [vmem:[%s286 + $0xe0] sm:$0xff]
        %v349 = vld [vmem:[%s286 + $0xe8] sm:$0xff]
        %v350 = vld [vmem:[%s286 + $0xf0] sm:$0xff]
        %v351 = vld [vmem:[%s286 + $0xf8] sm:$0xff]
        %v352 = vld [vmem:[%s286 + $0x100] sm:$0xff]
        %v353 = vld [vmem:[%s286 + $0x108] sm:$0xff]
        %v354 = vld [vmem:[%s286 + $0x110] sm:$0xff]
        %v355 = vld [vmem:[%s286 + $0x118] sm:$0xff]
        %v356 = vld [vmem:[%s286 + $0x120] sm:$0xff]
        %v357 = vld [vmem:[%s286 + $0x128] sm:$0xff]
        %v358 = vld [vmem:[%s286 + $0x130] sm:$0xff]
        %v359 = vld [vmem:[%s286 + $0x138] sm:$0xff]
        %v360 = vld [vmem:[%s286 + $0x140] sm:$0xff]
        %v361 = vld [vmem:[%s286 + $0x148] sm:$0xff]
        %v362 = vld [vmem:[%s286 + $0x150] sm:$0xff]
        %v363 = vld [vmem:[%s286 + $0x158] sm:$0xff]
        %v364 = vld [vmem:[%s286 + $0x160] sm:$0xff]
        %v365 = vld [vmem:[%s286 + $0x168] sm:$0xff]
        %v366 = vld [vmem:[%s286 + $0x170] sm:$0xff]
        %v367 = vld [vmem:[%s286 + $0x178] sm:$0xff]
        %v368 = vld [vmem:[%s286 + $0x180] sm:$0xff]
        %v369 = vld [vmem:[%s286 + $0x188] sm:$0xff]
        %v370 = vld [vmem:[%s286 + $0x190] sm:$0xff]
        %v371 = vld [vmem:[%s286 + $0x198] sm:$0xff]
        %v372 = vld [vmem:[%s286 + $0x1a0] sm:$0xff]
        %v373 = vld [vmem:[%s286 + $0x1a8] sm:$0xff]
        %v374 = vld [vmem:[%s286 + $0x1b0] sm:$0xff]
        %v375 = vld [vmem:[%s286 + $0x1b8] sm:$0xff]
        %v376 = vld [vmem:[%s286 + $0x1c0] sm:$0xff]
        %v377 = vld [vmem:[%s286 + $0x1c8] sm:$0xff]
        %v378 = vld [vmem:[%s286 + $0x1d0] sm:$0xff]
        %v379 = vld [vmem:[%s286 + $0x1d8] sm:$0xff]
        %v380 = vld [vmem:[%s286 + $0x1e0] sm:$0xff]
        %v381 = vld [vmem:[%s286 + $0x1e8] sm:$0xff]
        %v382 = vld [vmem:[%s286 + $0x1f0] sm:$0xff]
        %v383 = vld [vmem:[%s286 + $0x1f8] sm:$0xff]
        %v384 = vpack.c.bf16 %v322, %v320
        %v385 = vpack.c.bf16 %v323, %v321
        %v386 = vpack.c.bf16 %v326, %v324
        %v387 = vpack.c.bf16 %v327, %v325
        %v388 = vpack.c.bf16 %v330, %v328
        %v389 = vpack.c.bf16 %v331, %v329
        %v390 = vpack.c.bf16 %v334, %v332
        %v391 = vpack.c.bf16 %v335, %v333
        %v392 = vpack.c.bf16 %v338, %v336
        %v393 = vpack.c.bf16 %v339, %v337
        %v394 = vpack.c.bf16 %v342, %v340
        %v395 = vpack.c.bf16 %v343, %v341
        %v396 = vpack.c.bf16 %v346, %v344
        %v397 = vpack.c.bf16 %v347, %v345
        %v398 = vpack.c.bf16 %v350, %v348
        %v399 = vpack.c.bf16 %v351, %v349
        %v400 = vpack.c.bf16 %v354, %v352
        %v401 = vpack.c.bf16 %v355, %v353
        %v402 = vpack.c.bf16 %v358, %v356
        %v403 = vpack.c.bf16 %v359, %v357
        %v404 = vpack.c.bf16 %v362, %v360
        %v405 = vpack.c.bf16 %v363, %v361
        %v406 = vpack.c.bf16 %v366, %v364
        %v407 = vpack.c.bf16 %v367, %v365
        %v408 = vpack.c.bf16 %v370, %v368
        %v409 = vpack.c.bf16 %v371, %v369
        %v410 = vpack.c.bf16 %v374, %v372
        %v411 = vpack.c.bf16 %v375, %v373
        %v412 = vpack.c.bf16 %v378, %v376
        %v413 = vpack.c.bf16 %v379, %v377
        %v414 = vpack.c.bf16 %v382, %v380
        %v415 = vpack.c.bf16 %v383, %v381
        %v416 = vld [vmem:[%s1] sm:$0xff]
        %v417 = vld [vmem:[%s1 + $0x8] sm:$0xff]
        %v418 = vld [vmem:[%s1 + $0x10] sm:$0xff]
        %v419 = vld [vmem:[%s1 + $0x18] sm:$0xff]
        %v420 = vld [vmem:[%s1 + $0x20] sm:$0xff]
        %v421 = vld [vmem:[%s1 + $0x28] sm:$0xff]
        %v422 = vld [vmem:[%s1 + $0x30] sm:$0xff]
        %v423 = vld [vmem:[%s1 + $0x38] sm:$0xff]
        %v424 = vld [vmem:[%s1 + $0x40] sm:$0xff]
        %v425 = vld [vmem:[%s1 + $0x48] sm:$0xff]
        %v426 = vld [vmem:[%s1 + $0x50] sm:$0xff]
        %v427 = vld [vmem:[%s1 + $0x58] sm:$0xff]
        %v428 = vld [vmem:[%s1 + $0x60] sm:$0xff]
        %v429 = vld [vmem:[%s1 + $0x68] sm:$0xff]
        %v430 = vld [vmem:[%s1 + $0x70] sm:$0xff]
        %v431 = vld [vmem:[%s1 + $0x78] sm:$0xff]
        %v432 = vld [vmem:[%s2] sm:$0xff]
        %v433 = vld [vmem:[%s2 + $0x8] sm:$0xff]
        %v434 = vld [vmem:[%s2 + $0x10] sm:$0xff]
        %v435 = vld [vmem:[%s2 + $0x18] sm:$0xff]
        %v436 = vld [vmem:[%s2 + $0x20] sm:$0xff]
        %v437 = vld [vmem:[%s2 + $0x28] sm:$0xff]
        %v438 = vld [vmem:[%s2 + $0x30] sm:$0xff]
        %v439 = vld [vmem:[%s2 + $0x38] sm:$0xff]
        %v440 = vld [vmem:[%s2 + $0x40] sm:$0xff]
        %v441 = vld [vmem:[%s2 + $0x48] sm:$0xff]
        %v442 = vld [vmem:[%s2 + $0x50] sm:$0xff]
        %v443 = vld [vmem:[%s2 + $0x58] sm:$0xff]
        %v444 = vld [vmem:[%s2 + $0x60] sm:$0xff]
        %v445 = vld [vmem:[%s2 + $0x68] sm:$0xff]
        %v446 = vld [vmem:[%s2 + $0x70] sm:$0xff]
        %v447 = vld [vmem:[%s2 + $0x78] sm:$0xff]
        %449 = vset.pattern.permute.xlu0 0
        %450 = vperm.xlu0 %449, %v432
        %v451 = vpop.permute.xlu0 %450
        %454 = vset.pattern.permute.xlu0 0
        %455 = vperm.xlu0 %454, %v433
        %v456 = vpop.permute.xlu0 %455
        %459 = vset.pattern.permute.xlu0 0
        %460 = vperm.xlu0 %459, %v434
        %v461 = vpop.permute.xlu0 %460
        %464 = vset.pattern.permute.xlu0 0
        %465 = vperm.xlu0 %464, %v435
        %v466 = vpop.permute.xlu0 %465
        %469 = vset.pattern.permute.xlu0 0
        %470 = vperm.xlu0 %469, %v436
        %v471 = vpop.permute.xlu0 %470
        %474 = vset.pattern.permute.xlu0 0
        %475 = vperm.xlu0 %474, %v437
        %v476 = vpop.permute.xlu0 %475
        %479 = vset.pattern.permute.xlu0 0
        %480 = vperm.xlu0 %479, %v438
        %v481 = vpop.permute.xlu0 %480
        %484 = vset.pattern.permute.xlu0 0
        %485 = vperm.xlu0 %484, %v439
        %v486 = vpop.permute.xlu0 %485
        %489 = vset.pattern.permute.xlu0 0
        %490 = vperm.xlu0 %489, %v440
        %v491 = vpop.permute.xlu0 %490
        %494 = vset.pattern.permute.xlu0 0
        %495 = vperm.xlu0 %494, %v441
        %v496 = vpop.permute.xlu0 %495
        %499 = vset.pattern.permute.xlu0 0
        %500 = vperm.xlu0 %499, %v442
        %v501 = vpop.permute.xlu0 %500
        %504 = vset.pattern.permute.xlu0 0
        %505 = vperm.xlu0 %504, %v443
        %v506 = vpop.permute.xlu0 %505
        %509 = vset.pattern.permute.xlu0 0
        %510 = vperm.xlu0 %509, %v444
        %v511 = vpop.permute.xlu0 %510
        %514 = vset.pattern.permute.xlu0 0
        %515 = vperm.xlu0 %514, %v445
        %v516 = vpop.permute.xlu0 %515
        %519 = vset.pattern.permute.xlu0 0
        %520 = vperm.xlu0 %519, %v446
        %v521 = vpop.permute.xlu0 %520
        %524 = vset.pattern.permute.xlu0 0
        %525 = vperm.xlu0 %524, %v447
        %v526 = vpop.permute.xlu0 %525
        %v544 = vunpack.c.l.b16 %v416
        %v545 = vunpack.c.h.b16 %v416
        %v546 = vunpack.c.l.b16 %v417
        %v547 = vunpack.c.h.b16 %v417
        %v548 = vunpack.c.l.b16 %v418
        %v549 = vunpack.c.h.b16 %v418
        %v550 = vunpack.c.l.b16 %v419
        %v551 = vunpack.c.h.b16 %v419
        %v552 = vunpack.c.l.b16 %v420
        %v553 = vunpack.c.h.b16 %v420
        %v554 = vunpack.c.l.b16 %v421
        %v555 = vunpack.c.h.b16 %v421
        %v556 = vunpack.c.l.b16 %v422
        %v557 = vunpack.c.h.b16 %v422
        %v558 = vunpack.c.l.b16 %v423
        %v559 = vunpack.c.h.b16 %v423
        %v560 = vunpack.c.l.b16 %v424
        %v561 = vunpack.c.h.b16 %v424
        %v562 = vunpack.c.l.b16 %v425
        %v563 = vunpack.c.h.b16 %v425
        %v564 = vunpack.c.l.b16 %v426
        %v565 = vunpack.c.h.b16 %v426
        %v566 = vunpack.c.l.b16 %v427
        %v567 = vunpack.c.h.b16 %v427
        %v568 = vunpack.c.l.b16 %v428
        %v569 = vunpack.c.h.b16 %v428
        %v570 = vunpack.c.l.b16 %v429
        %v571 = vunpack.c.h.b16 %v429
        %v572 = vunpack.c.l.b16 %v430
        %v573 = vunpack.c.h.b16 %v430
        %v574 = vunpack.c.l.b16 %v431
        %v575 = vunpack.c.h.b16 %v431
        %v576 = vpack.c.b16 %v546, %v544
        %v577 = vpack.c.b16 %v547, %v545
        %v578 = vpack.c.b16 %v550, %v548
        %v579 = vpack.c.b16 %v551, %v549
        %v580 = vpack.c.b16 %v554, %v552
        %v581 = vpack.c.b16 %v555, %v553
        %v582 = vpack.c.b16 %v558, %v556
        %v583 = vpack.c.b16 %v559, %v557
        %v584 = vpack.c.b16 %v562, %v560
        %v585 = vpack.c.b16 %v563, %v561
        %v586 = vpack.c.b16 %v566, %v564
        %v587 = vpack.c.b16 %v567, %v565
        %v588 = vpack.c.b16 %v570, %v568
        %v589 = vpack.c.b16 %v571, %v569
        %v590 = vpack.c.b16 %v574, %v572
        %v591 = vpack.c.b16 %v575, %v573
        %608 = vmatprep.subr.bf16.mxu0 %v385
        %609 = vmatpush1.bf16.msra.mxu0 %v384
        %610 = vmatprep.subr.bf16.mxu0 %v387
        %611 = vmatpush1.bf16.msra.mxu0 %v386
        %612 = vmatprep.subr.bf16.mxu0 %v389
        %613 = vmatpush1.bf16.msra.mxu0 %v388
        %614 = vmatprep.subr.bf16.mxu0 %v391
        %615 = vmatpush1.bf16.msra.mxu0 %v390
        %616 = vmatprep.subr.bf16.mxu0 %v393
        %617 = vmatpush1.bf16.msra.mxu0 %v392
        %618 = vmatprep.subr.bf16.mxu0 %v395
        %619 = vmatpush1.bf16.msra.mxu0 %v394
        %620 = vmatprep.subr.bf16.mxu0 %v397
        %621 = vmatpush1.bf16.msra.mxu0 %v396
        %622 = vmatprep.subr.bf16.mxu0 %v399
        %623 = vmatpush1.bf16.msra.mxu0 %v398
        %624 = vmatprep.subr.bf16.mxu0 %v401
        %625 = vmatpush1.bf16.msra.mxu0 %v400
        %626 = vmatprep.subr.bf16.mxu0 %v403
        %627 = vmatpush1.bf16.msra.mxu0 %v402
        %628 = vmatprep.subr.bf16.mxu0 %v405
        %629 = vmatpush1.bf16.msra.mxu0 %v404
        %630 = vmatprep.subr.bf16.mxu0 %v407
        %631 = vmatpush1.bf16.msra.mxu0 %v406
        %632 = vmatprep.subr.bf16.mxu0 %v409
        %633 = vmatpush1.bf16.msra.mxu0 %v408
        %634 = vmatprep.subr.bf16.mxu0 %v411
        %635 = vmatpush1.bf16.msra.mxu0 %v410
        %636 = vmatprep.subr.bf16.mxu0 %v413
        %637 = vmatpush1.bf16.msra.mxu0 %v412
        %638 = vmatprep.subr.bf16.mxu0 %v415
        %639 = vmatpush1.bf16.msra.mxu0 %v414
        %640 = vmatprep.mubr.bf16.mxu0 %v577
        %641 = vmatmul.mubr.bf16.gmra.mrb[0].mxu0 %v576
        %v642 = vpop.f32.mrb[0].mxu0
        %v643 = vadd.f32 %v451, %v642
        %v644 = vpop.f32.mrb[0].mxu0
        %v645 = vadd.f32 %v451, %v644
        %v646 = vpop.f32.mrb[0].mxu0
        %v647 = vadd.f32 %v456, %v646
        %v648 = vpop.f32.mrb[0].mxu0
        %v649 = vadd.f32 %v456, %v648
        %650 = vmatprep.mubr.bf16.mxu0 %v579
        %651 = vmatmul.mubr.bf16.gmra.mrb[0].mxu0 %v578
        %v652 = vpop.f32.mrb[0].mxu0
        %v653 = vadd.f32 %v461, %v652
        %v654 = vpop.f32.mrb[0].mxu0
        %v655 = vadd.f32 %v461, %v654
        %v656 = vpop.f32.mrb[0].mxu0
        %v657 = vadd.f32 %v466, %v656
        %v658 = vpop.f32.mrb[0].mxu0
        %v659 = vadd.f32 %v466, %v658
        %660 = vmatprep.mubr.bf16.mxu0 %v581
        %661 = vmatmul.mubr.bf16.gmra.mrb[0].mxu0 %v580
        %v662 = vpop.f32.mrb[0].mxu0
        %v663 = vadd.f32 %v471, %v662
        %v664 = vpop.f32.mrb[0].mxu0
        %v665 = vadd.f32 %v471, %v664
        %v666 = vpop.f32.mrb[0].mxu0
        %v667 = vadd.f32 %v476, %v666
        %v668 = vpop.f32.mrb[0].mxu0
        %v669 = vadd.f32 %v476, %v668
        %670 = vmatprep.mubr.bf16.mxu0 %v583
        %671 = vmatmul.mubr.bf16.gmra.mrb[0].mxu0 %v582
        %v672 = vpop.f32.mrb[0].mxu0
        %v673 = vadd.f32 %v481, %v672
        %v674 = vpop.f32.mrb[0].mxu0
        %v675 = vadd.f32 %v481, %v674
        %v676 = vpop.f32.mrb[0].mxu0
        %v677 = vadd.f32 %v486, %v676
        %v678 = vpop.f32.mrb[0].mxu0
        %v679 = vadd.f32 %v486, %v678
        %680 = vmatprep.mubr.bf16.mxu0 %v585
        %681 = vmatmul.mubr.bf16.gmra.mrb[0].mxu0 %v584
        %v682 = vpop.f32.mrb[0].mxu0
        %v683 = vadd.f32 %v491, %v682
        %v684 = vpop.f32.mrb[0].mxu0
        %v685 = vadd.f32 %v491, %v684
        %v686 = vpop.f32.mrb[0].mxu0
        %v687 = vadd.f32 %v496, %v686
        %v688 = vpop.f32.mrb[0].mxu0
        %v689 = vadd.f32 %v496, %v688
        %690 = vmatprep.mubr.bf16.mxu0 %v587
        %691 = vmatmul.mubr.bf16.gmra.mrb[0].mxu0 %v586
        %v692 = vpop.f32.mrb[0].mxu0
        %v693 = vadd.f32 %v501, %v692
        %v694 = vpop.f32.mrb[0].mxu0
        %v695 = vadd.f32 %v501, %v694
        %v696 = vpop.f32.mrb[0].mxu0
        %v697 = vadd.f32 %v506, %v696
        %v698 = vpop.f32.mrb[0].mxu0
        %v699 = vadd.f32 %v506, %v698
        %700 = vmatprep.mubr.bf16.mxu0 %v589
        %701 = vmatmul.mubr.bf16.gmra.mrb[0].mxu0 %v588
        %v702 = vpop.f32.mrb[0].mxu0
        %v703 = vadd.f32 %v511, %v702
        %v704 = vpop.f32.mrb[0].mxu0
        %v705 = vadd.f32 %v511, %v704
        %v706 = vpop.f32.mrb[0].mxu0
        %v707 = vadd.f32 %v516, %v706
        %v708 = vpop.f32.mrb[0].mxu0
        %v709 = vadd.f32 %v516, %v708
        %710 = vmatprep.mubr.bf16.mxu0 %v591
        %711 = vmatmul.mubr.bf16.gmra.mrb[0].mxu0 %v590
        %v712 = vpop.f32.mrb[0].mxu0
        %v713 = vadd.f32 %v521, %v712
        %v714 = vpop.f32.mrb[0].mxu0
        %v715 = vadd.f32 %v521, %v714
        %v716 = vpop.f32.mrb[0].mxu0
        %v717 = vadd.f32 %v526, %v716
        %v718 = vpop.f32.mrb[0].mxu0
        %v719 = vadd.f32 %v526, %v718
        %720 = vdwg.mxu0
        %vm721 = vcmp.gt.f32.partialorder %v643, 0.0
        %vm722 = vcmp.gt.f32.partialorder %v645, 0.0
        %vm723 = vcmp.gt.f32.partialorder %v647, 0.0
        %vm724 = vcmp.gt.f32.partialorder %v649, 0.0
        %vm725 = vcmp.gt.f32.partialorder %v653, 0.0
        %vm726 = vcmp.gt.f32.partialorder %v655, 0.0
        %vm727 = vcmp.gt.f32.partialorder %v657, 0.0
        %vm728 = vcmp.gt.f32.partialorder %v659, 0.0
        %vm729 = vcmp.gt.f32.partialorder %v663, 0.0
        %vm730 = vcmp.gt.f32.partialorder %v665, 0.0
        %vm731 = vcmp.gt.f32.partialorder %v667, 0.0
        %vm732 = vcmp.gt.f32.partialorder %v669, 0.0
        %vm733 = vcmp.gt.f32.partialorder %v673, 0.0
        %vm734 = vcmp.gt.f32.partialorder %v675, 0.0
        %vm735 = vcmp.gt.f32.partialorder %v677, 0.0
        %vm736 = vcmp.gt.f32.partialorder %v679, 0.0
        %vm737 = vcmp.gt.f32.partialorder %v683, 0.0
        %vm738 = vcmp.gt.f32.partialorder %v685, 0.0
        %vm739 = vcmp.gt.f32.partialorder %v687, 0.0
        %vm740 = vcmp.gt.f32.partialorder %v689, 0.0
        %vm741 = vcmp.gt.f32.partialorder %v693, 0.0
        %vm742 = vcmp.gt.f32.partialorder %v695, 0.0
        %vm743 = vcmp.gt.f32.partialorder %v697, 0.0
        %vm744 = vcmp.gt.f32.partialorder %v699, 0.0
        %vm745 = vcmp.gt.f32.partialorder %v703, 0.0
        %vm746 = vcmp.gt.f32.partialorder %v705, 0.0
        %vm747 = vcmp.gt.f32.partialorder %v707, 0.0
        %vm748 = vcmp.gt.f32.partialorder %v709, 0.0
        %vm749 = vcmp.gt.f32.partialorder %v713, 0.0
        %vm750 = vcmp.gt.f32.partialorder %v715, 0.0
        %vm751 = vcmp.gt.f32.partialorder %v717, 0.0
        %vm752 = vcmp.gt.f32.partialorder %v719, 0.0
        %v753 = vmul.f32 %v643, 0.2
        %v754 = vmul.f32 %v645, 0.2
        %v755 = vmul.f32 %v647, 0.2
        %v756 = vmul.f32 %v649, 0.2
        %v757 = vmul.f32 %v653, 0.2
        %v758 = vmul.f32 %v655, 0.2
        %v759 = vmul.f32 %v657, 0.2
        %v760 = vmul.f32 %v659, 0.2
        %v761 = vmul.f32 %v663, 0.2
        %v762 = vmul.f32 %v665, 0.2
        %v763 = vmul.f32 %v667, 0.2
        %v764 = vmul.f32 %v669, 0.2
        %v765 = vmul.f32 %v673, 0.2
        %v766 = vmul.f32 %v675, 0.2
        %v767 = vmul.f32 %v677, 0.2
        %v768 = vmul.f32 %v679, 0.2
        %v769 = vmul.f32 %v683, 0.2
        %v770 = vmul.f32 %v685, 0.2
        %v771 = vmul.f32 %v687, 0.2
        %v772 = vmul.f32 %v689, 0.2
        %v773 = vmul.f32 %v693, 0.2
        %v774 = vmul.f32 %v695, 0.2
        %v775 = vmul.f32 %v697, 0.2
        %v776 = vmul.f32 %v699, 0.2
        %v777 = vmul.f32 %v703, 0.2
        %v778 = vmul.f32 %v705, 0.2
        %v779 = vmul.f32 %v707, 0.2
        %v780 = vmul.f32 %v709, 0.2
        %v781 = vmul.f32 %v713, 0.2
        %v782 = vmul.f32 %v715, 0.2
        %v783 = vmul.f32 %v717, 0.2
        %v784 = vmul.f32 %v719, 0.2
        %v785 = vsel %vm721, %v643, %v753
        %v786 = vsel %vm722, %v645, %v754
        %v787 = vsel %vm723, %v647, %v755
        %v788 = vsel %vm724, %v649, %v756
        %v789 = vsel %vm725, %v653, %v757
        %v790 = vsel %vm726, %v655, %v758
        %v791 = vsel %vm727, %v657, %v759
        %v792 = vsel %vm728, %v659, %v760
        %v793 = vsel %vm729, %v663, %v761
        %v794 = vsel %vm730, %v665, %v762
        %v795 = vsel %vm731, %v667, %v763
        %v796 = vsel %vm732, %v669, %v764
        %v797 = vsel %vm733, %v673, %v765
        %v798 = vsel %vm734, %v675, %v766
        %v799 = vsel %vm735, %v677, %v767
        %v800 = vsel %vm736, %v679, %v768
        %v801 = vsel %vm737, %v683, %v769
        %v802 = vsel %vm738, %v685, %v770
        %v803 = vsel %vm739, %v687, %v771
        %v804 = vsel %vm740, %v689, %v772
        %v805 = vsel %vm741, %v693, %v773
        %v806 = vsel %vm742, %v695, %v774
        %v807 = vsel %vm743, %v697, %v775
        %v808 = vsel %vm744, %v699, %v776
        %v809 = vsel %vm745, %v703, %v777
        %v810 = vsel %vm746, %v705, %v778
        %v811 = vsel %vm747, %v707, %v779
        %v812 = vsel %vm748, %v709, %v780
        %v813 = vsel %vm749, %v713, %v781
        %v814 = vsel %vm750, %v715, %v782
        %v815 = vsel %vm751, %v717, %v783
        %v816 = vsel %vm752, %v719, %v784
        %v817 = vld [vmem:[%s3] sm:$0xf]
        %v818 = vld [vmem:[%s3 + $0x4] sm:$0xf]
        %v819 = vld [vmem:[%s3 + $0x8] sm:$0xf]
        %v820 = vld [vmem:[%s3 + $0xc] sm:$0xf]
        %v821 = vld [vmem:[%s3 + $0x10] sm:$0xf]
        %v822 = vld [vmem:[%s3 + $0x14] sm:$0xf]
        %v823 = vld [vmem:[%s3 + $0x18] sm:$0xf]
        %v824 = vld [vmem:[%s3 + $0x1c] sm:$0xf]
        %v825 = vld [vmem:[%s3 + $0x20] sm:$0xf]
        %v826 = vld [vmem:[%s3 + $0x24] sm:$0xf]
        %v827 = vld [vmem:[%s3 + $0x28] sm:$0xf]
        %v828 = vld [vmem:[%s3 + $0x2c] sm:$0xf]
        %v829 = vld [vmem:[%s3 + $0x30] sm:$0xf]
        %v830 = vld [vmem:[%s3 + $0x34] sm:$0xf]
        %v831 = vld [vmem:[%s3 + $0x38] sm:$0xf]
        %v832 = vld [vmem:[%s3 + $0x3c] sm:$0xf]
        %v833 = vpack.c.bf16 %v787, %v785
        %v834 = vpack.c.bf16 %v788, %v786
        %v835 = vpack.c.bf16 %v791, %v789
        %v836 = vpack.c.bf16 %v792, %v790
        %v837 = vpack.c.bf16 %v795, %v793
        %v838 = vpack.c.bf16 %v796, %v794
        %v839 = vpack.c.bf16 %v799, %v797
        %v840 = vpack.c.bf16 %v800, %v798
        %v841 = vpack.c.bf16 %v803, %v801
        %v842 = vpack.c.bf16 %v804, %v802
        %v843 = vpack.c.bf16 %v807, %v805
        %v844 = vpack.c.bf16 %v808, %v806
        %v845 = vpack.c.bf16 %v811, %v809
        %v846 = vpack.c.bf16 %v812, %v810
        %v847 = vpack.c.bf16 %v815, %v813
        %v848 = vpack.c.bf16 %v816, %v814
        %v849 = vld [vmem:[%s4] sm:$0xff]
        %v850 = vld [vmem:[%s4 + $0x8] sm:$0xff]
        %v851 = vld [vmem:[%s4 + $0x10] sm:$0xff]
        %v852 = vld [vmem:[%s4 + $0x18] sm:$0xff]
        %v853 = vld [vmem:[%s4 + $0x20] sm:$0xff]
        %v854 = vld [vmem:[%s4 + $0x28] sm:$0xff]
        %v855 = vld [vmem:[%s4 + $0x30] sm:$0xff]
        %v856 = vld [vmem:[%s4 + $0x38] sm:$0xff]
        %v857 = vld [vmem:[%s4 + $0x40] sm:$0xff]
        %v858 = vld [vmem:[%s4 + $0x48] sm:$0xff]
        %v859 = vld [vmem:[%s4 + $0x50] sm:$0xff]
        %v860 = vld [vmem:[%s4 + $0x58] sm:$0xff]
        %v861 = vld [vmem:[%s4 + $0x60] sm:$0xff]
        %v862 = vld [vmem:[%s4 + $0x68] sm:$0xff]
        %v863 = vld [vmem:[%s4 + $0x70] sm:$0xff]
        %v864 = vld [vmem:[%s4 + $0x78] sm:$0xff]
        %866 = vset.pattern.permute.xlu0 0
        %867 = vperm.xlu0 %866, %v849
        %v868 = vpop.permute.xlu0 %867
        %871 = vset.pattern.permute.xlu0 0
        %872 = vperm.xlu0 %871, %v850
        %v873 = vpop.permute.xlu0 %872
        %876 = vset.pattern.permute.xlu0 0
        %877 = vperm.xlu0 %876, %v851
        %v878 = vpop.permute.xlu0 %877
        %881 = vset.pattern.permute.xlu0 0
        %882 = vperm.xlu0 %881, %v852
        %v883 = vpop.permute.xlu0 %882
        %886 = vset.pattern.permute.xlu0 0
        %887 = vperm.xlu0 %886, %v853
        %v888 = vpop.permute.xlu0 %887
        %891 = vset.pattern.permute.xlu0 0
        %892 = vperm.xlu0 %891, %v854
        %v893 = vpop.permute.xlu0 %892
        %896 = vset.pattern.permute.xlu0 0
        %897 = vperm.xlu0 %896, %v855
        %v898 = vpop.permute.xlu0 %897
        %901 = vset.pattern.permute.xlu0 0
        %902 = vperm.xlu0 %901, %v856
        %v903 = vpop.permute.xlu0 %902
        %906 = vset.pattern.permute.xlu0 0
        %907 = vperm.xlu0 %906, %v857
        %v908 = vpop.permute.xlu0 %907
        %911 = vset.pattern.permute.xlu0 0
        %912 = vperm.xlu0 %911, %v858
        %v913 = vpop.permute.xlu0 %912
        %916 = vset.pattern.permute.xlu0 0
        %917 = vperm.xlu0 %916, %v859
        %v918 = vpop.permute.xlu0 %917
        %921 = vset.pattern.permute.xlu0 0
        %922 = vperm.xlu0 %921, %v860
        %v923 = vpop.permute.xlu0 %922
        %926 = vset.pattern.permute.xlu0 0
        %927 = vperm.xlu0 %926, %v861
        %v928 = vpop.permute.xlu0 %927
        %931 = vset.pattern.permute.xlu0 0
        %932 = vperm.xlu0 %931, %v862
        %v933 = vpop.permute.xlu0 %932
        %936 = vset.pattern.permute.xlu0 0
        %937 = vperm.xlu0 %936, %v863
        %v938 = vpop.permute.xlu0 %937
        %941 = vset.pattern.permute.xlu0 0
        %942 = vperm.xlu0 %941, %v864
        %v943 = vpop.permute.xlu0 %942
        %v961 = vunpack.c.l.b16 %v817
        %v962 = vunpack.c.l.b16 %v818
        %v963 = vunpack.c.l.b16 %v819
        %v964 = vunpack.c.l.b16 %v820
        %v965 = vunpack.c.l.b16 %v821
        %v966 = vunpack.c.l.b16 %v822
        %v967 = vunpack.c.l.b16 %v823
        %v968 = vunpack.c.l.b16 %v824
        %v969 = vunpack.c.l.b16 %v825
        %v970 = vunpack.c.l.b16 %v826
        %v971 = vunpack.c.l.b16 %v827
        %v972 = vunpack.c.l.b16 %v828
        %v973 = vunpack.c.l.b16 %v829
        %v974 = vunpack.c.l.b16 %v830
        %v975 = vunpack.c.l.b16 %v831
        %v976 = vunpack.c.l.b16 %v832
        %v977 = vpack.c.b16 %v962, %v961
        %v978 = vpack.c.b16 %v964, %v963
        %v979 = vpack.c.b16 %v966, %v965
        %v980 = vpack.c.b16 %v968, %v967
        %v981 = vpack.c.b16 %v970, %v969
        %v982 = vpack.c.b16 %v972, %v971
        %v983 = vpack.c.b16 %v974, %v973
        %v984 = vpack.c.b16 %v976, %v975
        %993 = vmatprep.subr.bf16.mxu0 %v834
        %994 = vmatpush1.bf16.msra.mxu0 %v833
        %995 = vmatprep.subr.bf16.mxu0 %v836
        %996 = vmatpush1.bf16.msra.mxu0 %v835
        %997 = vmatprep.subr.bf16.mxu0 %v838
        %998 = vmatpush1.bf16.msra.mxu0 %v837
        %999 = vmatprep.subr.bf16.mxu0 %v840
        %1000 = vmatpush1.bf16.msra.mxu0 %v839
        %1001 = vmatprep.subr.bf16.mxu0 %v842
        %1002 = vmatpush1.bf16.msra.mxu0 %v841
        %1003 = vmatprep.subr.bf16.mxu0 %v844
        %1004 = vmatpush1.bf16.msra.mxu0 %v843
        %1005 = vmatprep.subr.bf16.mxu0 %v846
        %1006 = vmatpush1.bf16.msra.mxu0 %v845
        %1007 = vmatprep.subr.bf16.mxu0 %v848
        %1008 = vmatpush1.bf16.msra.mxu0 %v847
        %1009 = vmatprep.subr.bf16.mxu0 0
        %1010 = vmatpush1.bf16.msra.mxu0 0
        %1011 = vmatprep.subr.bf16.mxu0 0
        %1012 = vmatpush1.bf16.msra.mxu0 0
        %1013 = vmatprep.subr.bf16.mxu0 0
        %1014 = vmatpush1.bf16.msra.mxu0 0
        %1015 = vmatprep.subr.bf16.mxu0 0
        %1016 = vmatpush1.bf16.msra.mxu0 0
        %1017 = vmatprep.subr.bf16.mxu0 0
        %1018 = vmatpush1.bf16.msra.mxu0 0
        %1019 = vmatprep.subr.bf16.mxu0 0
        %1020 = vmatpush1.bf16.msra.mxu0 0
        %1021 = vmatprep.subr.bf16.mxu0 0
        %1022 = vmatpush1.bf16.msra.mxu0 0
        %1023 = vmatprep.subr.bf16.mxu0 0
        %1024 = vmatpush1.bf16.msra.mxu0 0
        %1025 = vmatprep.mubr.bf16.mxu0 0
        %1026 = vmatmul.mubr.bf16.gmra.mrb[0].mxu0 %v977
        %v1027 = vpop.f32.mrb[0].mxu0
        %v1028 = vadd.f32 %v868, %v1027
        %v1029 = vpop.f32.mrb[0].mxu0
        %v1030 = vadd.f32 %v868, %v1029
        %v1031 = vpop.f32.mrb[0].mxu0
        %v1032 = vadd.f32 %v873, %v1031
        %v1033 = vpop.f32.mrb[0].mxu0
        %v1034 = vadd.f32 %v873, %v1033
        %1035 = vmatprep.mubr.bf16.mxu0 0
        %1036 = vmatmul.mubr.bf16.gmra.mrb[0].mxu0 %v978
        %v1037 = vpop.f32.mrb[0].mxu0
        %v1038 = vadd.f32 %v878, %v1037
        %v1039 = vpop.f32.mrb[0].mxu0
        %v1040 = vadd.f32 %v878, %v1039
        %v1041 = vpop.f32.mrb[0].mxu0
        %v1042 = vadd.f32 %v883, %v1041
        %v1043 = vpop.f32.mrb[0].mxu0
        %v1044 = vadd.f32 %v883, %v1043
        %1045 = vmatprep.mubr.bf16.mxu0 0
        %1046 = vmatmul.mubr.bf16.gmra.mrb[0].mxu0 %v979
        %v1047 = vpop.f32.mrb[0].mxu0
        %v1048 = vadd.f32 %v888, %v1047
        %v1049 = vpop.f32.mrb[0].mxu0
        %v1050 = vadd.f32 %v888, %v1049
        %v1051 = vpop.f32.mrb[0].mxu0
        %v1052 = vadd.f32 %v893, %v1051
        %v1053 = vpop.f32.mrb[0].mxu0
        %v1054 = vadd.f32 %v893, %v1053
        %1055 = vmatprep.mubr.bf16.mxu0 0
        %1056 = vmatmul.mubr.bf16.gmra.mrb[0].mxu0 %v980
        %v1057 = vpop.f32.mrb[0].mxu0
        %v1058 = vadd.f32 %v898, %v1057
        %v1059 = vpop.f32.mrb[0].mxu0
        %v1060 = vadd.f32 %v898, %v1059
        %v1061 = vpop.f32.mrb[0].mxu0
        %v1062 = vadd.f32 %v903, %v1061
        %v1063 = vpop.f32.mrb[0].mxu0
        %v1064 = vadd.f32 %v903, %v1063
        %1065 = vmatprep.mubr.bf16.mxu0 0
        %1066 = vmatmul.mubr.bf16.gmra.mrb[0].mxu0 %v981
        %v1067 = vpop.f32.mrb[0].mxu0
        %v1068 = vadd.f32 %v908, %v1067
        %v1069 = vpop.f32.mrb[0].mxu0
        %v1070 = vadd.f32 %v908, %v1069
        %v1071 = vpop.f32.mrb[0].mxu0
        %v1072 = vadd.f32 %v913, %v1071
        %v1073 = vpop.f32.mrb[0].mxu0
        %v1074 = vadd.f32 %v913, %v1073
        %1075 = vmatprep.mubr.bf16.mxu0 0
        %1076 = vmatmul.mubr.bf16.gmra.mrb[0].mxu0 %v982
        %v1077 = vpop.f32.mrb[0].mxu0
        %v1078 = vadd.f32 %v918, %v1077
        %v1079 = vpop.f32.mrb[0].mxu0
        %v1080 = vadd.f32 %v918, %v1079
        %v1081 = vpop.f32.mrb[0].mxu0
        %v1082 = vadd.f32 %v923, %v1081
        %v1083 = vpop.f32.mrb[0].mxu0
        %v1084 = vadd.f32 %v923, %v1083
        %1085 = vmatprep.mubr.bf16.mxu0 0
        %1086 = vmatmul.mubr.bf16.gmra.mrb[0].mxu0 %v983
        %v1087 = vpop.f32.mrb[0].mxu0
        %v1088 = vadd.f32 %v928, %v1087
        %v1089 = vpop.f32.mrb[0].mxu0
        %v1090 = vadd.f32 %v928, %v1089
        %v1091 = vpop.f32.mrb[0].mxu0
        %v1092 = vadd.f32 %v933, %v1091
        %v1093 = vpop.f32.mrb[0].mxu0
        %v1094 = vadd.f32 %v933, %v1093
        %1095 = vmatprep.mubr.bf16.mxu0 0
        %1096 = vmatmul.mubr.bf16.gmra.mrb[0].mxu0 %v984
        %v1097 = vpop.f32.mrb[0].mxu0
        %v1098 = vadd.f32 %v938, %v1097
        %v1099 = vpop.f32.mrb[0].mxu0
        %v1100 = vadd.f32 %v938, %v1099
        %v1101 = vpop.f32.mrb[0].mxu0
        %v1102 = vadd.f32 %v943, %v1101
        %v1103 = vpop.f32.mrb[0].mxu0
        %v1104 = vadd.f32 %v943, %v1103
        %1105 = vdwg.mxu0
        %vm1106 = vcmp.gt.f32.partialorder %v1028, 0.0
        %vm1107 = vcmp.gt.f32.partialorder %v1030, 0.0
        %vm1108 = vcmp.gt.f32.partialorder %v1032, 0.0
        %vm1109 = vcmp.gt.f32.partialorder %v1034, 0.0
        %vm1110 = vcmp.gt.f32.partialorder %v1038, 0.0
        %vm1111 = vcmp.gt.f32.partialorder %v1040, 0.0
        %vm1112 = vcmp.gt.f32.partialorder %v1042, 0.0
        %vm1113 = vcmp.gt.f32.partialorder %v1044, 0.0
        %vm1114 = vcmp.gt.f32.partialorder %v1048, 0.0
        %vm1115 = vcmp.gt.f32.partialorder %v1050, 0.0
        %vm1116 = vcmp.gt.f32.partialorder %v1052, 0.0
        %vm1117 = vcmp.gt.f32.partialorder %v1054, 0.0
        %vm1118 = vcmp.gt.f32.partialorder %v1058, 0.0
        %vm1119 = vcmp.gt.f32.partialorder %v1060, 0.0
        %vm1120 = vcmp.gt.f32.partialorder %v1062, 0.0
        %vm1121 = vcmp.gt.f32.partialorder %v1064, 0.0
        %vm1122 = vcmp.gt.f32.partialorder %v1068, 0.0
        %vm1123 = vcmp.gt.f32.partialorder %v1070, 0.0
        %vm1124 = vcmp.gt.f32.partialorder %v1072, 0.0
        %vm1125 = vcmp.gt.f32.partialorder %v1074, 0.0
        %vm1126 = vcmp.gt.f32.partialorder %v1078, 0.0
        %vm1127 = vcmp.gt.f32.partialorder %v1080, 0.0
        %vm1128 = vcmp.gt.f32.partialorder %v1082, 0.0
        %vm1129 = vcmp.gt.f32.partialorder %v1084, 0.0
        %vm1130 = vcmp.gt.f32.partialorder %v1088, 0.0
        %vm1131 = vcmp.gt.f32.partialorder %v1090, 0.0
        %vm1132 = vcmp.gt.f32.partialorder %v1092, 0.0
        %vm1133 = vcmp.gt.f32.partialorder %v1094, 0.0
        %vm1134 = vcmp.gt.f32.partialorder %v1098, 0.0
        %vm1135 = vcmp.gt.f32.partialorder %v1100, 0.0
        %vm1136 = vcmp.gt.f32.partialorder %v1102, 0.0
        %vm1137 = vcmp.gt.f32.partialorder %v1104, 0.0
        %v1138 = vmul.f32 %v1028, 0.2
        %v1139 = vmul.f32 %v1030, 0.2
        %v1140 = vmul.f32 %v1032, 0.2
        %v1141 = vmul.f32 %v1034, 0.2
        %v1142 = vmul.f32 %v1038, 0.2
        %v1143 = vmul.f32 %v1040, 0.2
        %v1144 = vmul.f32 %v1042, 0.2
        %v1145 = vmul.f32 %v1044, 0.2
        %v1146 = vmul.f32 %v1048, 0.2
        %v1147 = vmul.f32 %v1050, 0.2
        %v1148 = vmul.f32 %v1052, 0.2
        %v1149 = vmul.f32 %v1054, 0.2
        %v1150 = vmul.f32 %v1058, 0.2
        %v1151 = vmul.f32 %v1060, 0.2
        %v1152 = vmul.f32 %v1062, 0.2
        %v1153 = vmul.f32 %v1064, 0.2
        %v1154 = vmul.f32 %v1068, 0.2
        %v1155 = vmul.f32 %v1070, 0.2
        %v1156 = vmul.f32 %v1072, 0.2
        %v1157 = vmul.f32 %v1074, 0.2
        %v1158 = vmul.f32 %v1078, 0.2
        %v1159 = vmul.f32 %v1080, 0.2
        %v1160 = vmul.f32 %v1082, 0.2
        %v1161 = vmul.f32 %v1084, 0.2
        %v1162 = vmul.f32 %v1088, 0.2
        %v1163 = vmul.f32 %v1090, 0.2
        %v1164 = vmul.f32 %v1092, 0.2
        %v1165 = vmul.f32 %v1094, 0.2
        %v1166 = vmul.f32 %v1098, 0.2
        %v1167 = vmul.f32 %v1100, 0.2
        %v1168 = vmul.f32 %v1102, 0.2
        %v1169 = vmul.f32 %v1104, 0.2
        %v1170 = vsel %vm1106, %v1028, %v1138
        %v1171 = vsel %vm1107, %v1030, %v1139
        %v1172 = vsel %vm1108, %v1032, %v1140
        %v1173 = vsel %vm1109, %v1034, %v1141
        %v1174 = vsel %vm1110, %v1038, %v1142
        %v1175 = vsel %vm1111, %v1040, %v1143
        %v1176 = vsel %vm1112, %v1042, %v1144
        %v1177 = vsel %vm1113, %v1044, %v1145
        %v1178 = vsel %vm1114, %v1048, %v1146
        %v1179 = vsel %vm1115, %v1050, %v1147
        %v1180 = vsel %vm1116, %v1052, %v1148
        %v1181 = vsel %vm1117, %v1054, %v1149
        %v1182 = vsel %vm1118, %v1058, %v1150
        %v1183 = vsel %vm1119, %v1060, %v1151
        %v1184 = vsel %vm1120, %v1062, %v1152
        %v1185 = vsel %vm1121, %v1064, %v1153
        %v1186 = vsel %vm1122, %v1068, %v1154
        %v1187 = vsel %vm1123, %v1070, %v1155
        %v1188 = vsel %vm1124, %v1072, %v1156
        %v1189 = vsel %vm1125, %v1074, %v1157
        %v1190 = vsel %vm1126, %v1078, %v1158
        %v1191 = vsel %vm1127, %v1080, %v1159
        %v1192 = vsel %vm1128, %v1082, %v1160
        %v1193 = vsel %vm1129, %v1084, %v1161
        %v1194 = vsel %vm1130, %v1088, %v1162
        %v1195 = vsel %vm1131, %v1090, %v1163
        %v1196 = vsel %vm1132, %v1092, %v1164
        %v1197 = vsel %vm1133, %v1094, %v1165
        %v1198 = vsel %vm1134, %v1098, %v1166
        %v1199 = vsel %vm1135, %v1100, %v1167
        %v1200 = vsel %vm1136, %v1102, %v1168
        %v1201 = vsel %vm1137, %v1104, %v1169
        %v1202 = vld [vmem:[%s5] sm:$0x1]
        %v1203 = vpack.c.bf16 %v1172, %v1170
        %v1204 = vpack.c.bf16 %v1173, %v1171
        %v1205 = vpack.c.bf16 %v1176, %v1174
        %v1206 = vpack.c.bf16 %v1177, %v1175
        %v1207 = vpack.c.bf16 %v1180, %v1178
        %v1208 = vpack.c.bf16 %v1181, %v1179
        %v1209 = vpack.c.bf16 %v1184, %v1182
        %v1210 = vpack.c.bf16 %v1185, %v1183
        %v1211 = vpack.c.bf16 %v1188, %v1186
        %v1212 = vpack.c.bf16 %v1189, %v1187
        %v1213 = vpack.c.bf16 %v1192, %v1190
        %v1214 = vpack.c.bf16 %v1193, %v1191
        %v1215 = vpack.c.bf16 %v1196, %v1194
        %v1216 = vpack.c.bf16 %v1197, %v1195
        %v1217 = vpack.c.bf16 %v1200, %v1198
        %v1218 = vpack.c.bf16 %v1201, %v1199
        %v1219 = vld [vmem:[#allocation2] sm:$0x1]
        %1221 = vset.pattern.permute.xlu0 0
        %1222 = vperm.xlu0 %1221, %v1219
        %v1223 = vpop.permute.xlu0 %1222
        %v1225 = vlaneseq
        %v1226 = vshrl.u32 %v1225, 7
        %v1227 = vsub.s32 0, %v1226
        %v1228 = vrot.slane %v1223, %v1227
        %1229 = vmatprep.subr.bf16.mxu0 %v1204
        %1230 = vmatpush1.bf16.msra.mxu0 %v1203
        %1231 = vmatprep.subr.bf16.mxu0 %v1206
        %1232 = vmatpush1.bf16.msra.mxu0 %v1205
        %1233 = vmatprep.subr.bf16.mxu0 %v1208
        %1234 = vmatpush1.bf16.msra.mxu0 %v1207
        %1235 = vmatprep.subr.bf16.mxu0 %v1210
        %1236 = vmatpush1.bf16.msra.mxu0 %v1209
        %1237 = vmatprep.subr.bf16.mxu0 %v1212
        %1238 = vmatpush1.bf16.msra.mxu0 %v1211
        %1239 = vmatprep.subr.bf16.mxu0 %v1214
        %1240 = vmatpush1.bf16.msra.mxu0 %v1213
        %1241 = vmatprep.subr.bf16.mxu0 %v1216
        %1242 = vmatpush1.bf16.msra.mxu0 %v1215
        %1243 = vmatprep.subr.bf16.mxu0 %v1218
        %1244 = vmatpush1.bf16.msra.mxu0 %v1217
        %1245 = vmatprep.subr.bf16.mxu0 0
        %1246 = vmatpush1.bf16.msra.mxu0 0
        %1247 = vmatprep.subr.bf16.mxu0 0
        %1248 = vmatpush1.bf16.msra.mxu0 0
        %1249 = vmatprep.subr.bf16.mxu0 0
        %1250 = vmatpush1.bf16.msra.mxu0 0
        %1251 = vmatprep.subr.bf16.mxu0 0
        %1252 = vmatpush1.bf16.msra.mxu0 0
        %1253 = vmatprep.subr.bf16.mxu0 0
        %1254 = vmatpush1.bf16.msra.mxu0 0
        %1255 = vmatprep.subr.bf16.mxu0 0
        %1256 = vmatpush1.bf16.msra.mxu0 0
        %1257 = vmatprep.subr.bf16.mxu0 0
        %1258 = vmatpush1.bf16.msra.mxu0 0
        %1259 = vmatprep.subr.bf16.mxu0 0
        %1260 = vmatpush1.bf16.msra.mxu0 0
        %1261 = vmatprep.mubr.bf16.mxu0 0
        %1262 = vmatmul.mubr.bf16.gmra.mrb[0].mxu0 %v1202
        %v1263 = vpop.f32.mrb[0].mxu0
        %v1264 = vadd.f32 %v1228, %v1263
        %v1265 = vpop.f32.mrb[0].mxu0
        %v1266 = vadd.f32 %v1228, %v1265
        %v1267 = vpop.f32.mrb[0].mxu0
        %v1268 = vpop.f32.mrb[0].mxu0
        %1269 = vdwg.mxu0
        %v1272 = vcombine.low %v1264, %v1266
        %v1274 = vunpack.c.l.s4 1966171168
        %v1275 = vunpack.c.0.s8 %v1274
        %v1276 = vlaneseq
        %v1277 = vshrl.u32 %v1276, 7
        %v1278 = vsub.s32 %v1275, %v1277
        %v1279 = vrot.slane %v1272, %v1278
        %v1281 = vunpack.c.l.s4 1966171168
        %v1282 = vunpack.c.0.s8 %v1281
        %v1283 = vlaneseq
        %v1284 = vshrl.u32 %v1283, 7
        %v1285 = vsub.s32 %v1282, %v1284
        %v1286 = vrot.slane %v1279, %v1285
        %v1288 = vlaneseq
        %vm1289 = vcmp.ge.s32.totalorder %v1288, 0
        %vm1290 = vcmp.lt.s32.totalorder %v1288, 256
        %vm1291 = vmand %vm1289, %vm1290
        %1292 = vst.msk [vmem:[%s316] sm:$0x3] %vm1291, %v1286
        %s1293 = sand.u32 %s202, 1
        %s1294 = scalar_lea.sflag [#allocation5], %s1293
        %s1295 = sand.u32 %s202, 1
        %s1296 = smul.addr %s1295, 2
        %s1297 = scalar_lea.vmem [#allocation6], %s1296
        // Predicated region
        $region53: #{tpu_custom_call.1} parent=47 // pred_check
          %p1298 = pneg %p212
        $region54: #{tpu_custom_call.1} parent=47 // pred_check_branch
          %1300 = sbr.rel (%p1298) target = $region56
        $region55: #{tpu_custom_call.1} parent=47 // pred_region
          %s1301 = smul.u32 2, %s31
          %s1303 = ssub.s32 32, 32
          %1304 = vsyncadd %s1294, %s1303
          %s1305 = smul.addr %s30, 2
          %s1306 = sadd.s32 %s1301, %s1305
          %s1307 = smul.addr %s1306, 16
          %s1308 = scalar_lea.hbm %s7, %s1307
          %s1310 = sshll.u32 %s1297, 4
          %s1311 = int_to_ptr.vmem [resolvable:$true] %s1310
          %1313 = dma.vmem_to_hbm [thread:$0]  %s1311, 32, %s1308, %s1294
        $region56: #{tpu_custom_call.1} parent=47 // pred_fallthru
          _
      $region48: #{tpu_custom_call.1} parent=5 // pred_fallthru
        _
      %p1314 = scmp.le.s32.totalorder 2, %s21
      // Predicated region
      $region57: #{tpu_custom_call.1} parent=5 // pred_check
        %p1315 = pneg %p1314
      $region58: #{tpu_custom_call.1} parent=5 // pred_check_branch
        %1317 = sbr.rel (%p1315) target = $region60
      $region59: #{tpu_custom_call.1} parent=5 // pred_region
        %s1318 = ssub.s32 %s21, 2
        // Predicated region
        $region61: #{tpu_custom_call.1} parent=59 // pred_check
          %p1319 = pneg %p218
        $region62: #{tpu_custom_call.1} parent=59 // pred_check_branch
          %1321 = sbr.rel (%p1319) target = $region64
        $region63: #{tpu_custom_call.1} parent=59 // pred_region
          %s1322 = sand.u32 %s203, 1
          %s1323 = scalar_lea.sflag [#allocation5], %s1322
          %s1324 = sand.u32 %s203, 1
          %s1325 = smul.addr %s1324, 2
          %s1326 = scalar_lea.vmem [#allocation6], %s1325
          %1327 = dma.done %s1323, 32
        $region64: #{tpu_custom_call.1} parent=59 // pred_fallthru
          _
      $region60: #{tpu_custom_call.1} parent=5 // pred_fallthru
        _
    $region6: #{tpu_custom_call.1} parent=1 // loop_footer
      %s25 = sadd.s32 1, %s21
    $region7: #{tpu_custom_call.1} parent=1 // loop_footer_branch
      %20 = sbr.rel target = $region3
    $region8: #{tpu_custom_call.1} parent=1 // loop_exit
      _
    %1328 = vsyncpa [#allocation4], 1
    %s1329 = scalar_lea.sflag [#allocation4], 1
    %1330 = vsyncpa %s1329, 1
    %1331 = vsyncpa [#allocation5], 1
    %s1332 = scalar_lea.sflag [#allocation5], 1
    %1333 = vsyncpa %s1332, 1

</llo_original>
